<compile_context>
chip_gen: v5e
topology: v5e:2x2
jax: 0.10.0
libtpu: 0.0.40
codegen_flags: <defaults>
</compile_context>

<pallas_src>
import functools

import jax
import jax.numpy as jnp
from jax.experimental import pallas as pl
from jax.experimental.pallas import tpu as pltpu

EPS = 1e-5          # nn.InstanceNorm1d / nn.BatchNorm1d default eps
LRELU_SLOPE = 0.2   # assumed slope for activation 'lrelu'
LANE = 128


def _round_up(x, m):
    return (x + m - 1) // m * m


def _lrelu(x):
    return jnp.where(x >= 0, x, LRELU_SLOPE * x)


def decoder5_kernel(x_ref, z_ref, adj_ref, dis_ref, w_mlp_ref, w_pb_ref,
                    w_gcn_ref, v_gcn_ref, out_ref):
    """Whole decoder in one grid=() invocation; everything lives in VMEM.

    x_ref   : (B, N, WP)  f32   node features zero-padded to WP (mult. of 128)
    z_ref   : (B, PBK)    f32   [latent | style | 1 | 0-pad] per-batch vector
    adj_ref : (B, N, N)   bf16  dense per-graph adjacency
    dis_ref : (B, N, 1)   f32   D^-1/2 (sym ChebConv normalization)
    w_mlp_ref: (4, WP, WP)      bf16 node-path MLP weights (zero padded)
    w_pb_ref : (PBK, 12*WP) f32 fused per-batch weights at 128-lane stride:
                                4x pre-norm additive (latent term for unit 0 +
                                linear bias), then (gamma, beta) per unit
    w_gcn_ref: (2, WP, 2*WP)    bf16 ChebConv [W0 | W1], split at lane WP
    v_gcn_ref: (2, 3, WP) f32   per unit: [cheb bias, bn_gamma, bn_beta]
    out_ref : (B, N, WP)  f32   lane-dense output slab
    """
    B, N, WP = x_ref.shape
    n_mlp = w_mlp_ref.shape[0]
    n_gcn = w_gcn_ref.shape[0]

    # One fused per-batch dot: fc1 latent term, all linear biases, and all
    # style gamma/beta projections (their biases ride on the constant-1
    # column of z).  Independent of node data -> off the critical path.
    pb = jnp.dot(z_ref[...], w_pb_ref[...],
                 preferred_element_type=jnp.float32)        # (B, 12*WP)

    def chunk(i):                                  # 128-aligned static slice
        return pb[:, i * WP:(i + 1) * WP][:, None, :]        # (B, 1, WP)

    h2 = x_ref[...].reshape(B * N, WP)                        # f32, flat nodes

    # ---------------- 4x MLP_Graph_Unit ----------------
    for u in range(n_mlp):
        y = jnp.dot(h2.astype(jnp.bfloat16), w_mlp_ref[u],
                    preferred_element_type=jnp.float32)       # (B*N, WP)
        y = y.reshape(B, N, WP) + chunk(u)   # + linear bias (+ latent for u=0)
        # InstanceNorm1d: per (batch, channel), stats over nodes, one pass.
        mean = jnp.mean(y, axis=1, keepdims=True)
        msq = jnp.mean(y * y, axis=1, keepdims=True)
        var = jnp.maximum(msq - mean * mean, 0.0)
        yn = (y - mean) * jax.lax.rsqrt(var + EPS)
        # AdaIN-style modulation from style_vector.
        gamma = chunk(n_mlp + 2 * u)
        beta = chunk(n_mlp + 2 * u + 1)
        h2 = _lrelu(yn * (1.0 + gamma) + beta).reshape(B * N, WP)

    # ---------------- 2x GCN_Unit (cheb K=2 + BatchNorm + lrelu) -------------
    adj = adj_ref[...]          # (B, N, N) bf16
    dis = dis_ref[...]          # (B, N, 1) f32
    for u in range(n_gcn):
        vg = v_gcn_ref[u]       # (3, WP) f32
        # Single feature matmul for both Chebyshev terms ([W0 | W1] stacked);
        # (L@h)@W1 == L@(h@W1) by associativity, with the D^-1/2 scaling fused
        # into the einsum instead of materializing lhat.
        zz = jnp.dot(h2.astype(jnp.bfloat16), w_gcn_ref[u],
                     preferred_element_type=jnp.float32)      # (B*N, 2*WP)
        zz = zz.reshape(B, N, 2 * WP)
        t = (zz[..., WP:] * dis).astype(jnp.bfloat16)         # D^-1/2 (h@W1)
        y3 = zz[..., :WP] - dis * jnp.einsum(
            'bmn,bno->bmo', adj, t, preferred_element_type=jnp.float32)
        y = y3.reshape(B * N, WP) + vg[0:1]                   # + cheb bias
        # BatchNorm1d, training-mode stats over all B*N nodes, one pass.
        mean = jnp.mean(y, axis=0, keepdims=True)
        msq = jnp.mean(y * y, axis=0, keepdims=True)
        var = jnp.maximum(msq - mean * mean, 0.0)
        yn = (y - mean) * jax.lax.rsqrt(var + EPS)
        h2 = _lrelu(yn * vg[1:2] + vg[2:3])

    out_ref[...] = h2.reshape(B, N, WP).astype(out_ref.dtype)


def init_params(key, input_size, latent_size, style_dim, output_size):
    """Raw per-layer parameters mirroring the PyTorch module structure."""
    F = input_size + latent_size
    F2 = 2 * F
    keys = iter(jax.random.split(key, 64))

    def lin(i, o, scale=None):
        s = scale if scale is not None else 1.0 / float(i) ** 0.5
        return jax.random.normal(next(keys), (i, o), jnp.float32) * s

    params = []
    # fc1..fc4: weight (in,out) + bias + style gamma proj (+bias) + beta proj (+bias)
    for (fi, fo) in [(F, F), (F, F), (F, F2), (F2, F2)]:
        params += [
            lin(fi, fo), jnp.zeros((1, fo), jnp.float32),
            lin(style_dim, fo, 0.1), jnp.zeros((1, fo), jnp.float32),
            lin(style_dim, fo, 0.1), jnp.zeros((1, fo), jnp.float32),
        ]
    # graphconvblock1: ChebConv(F2->F2, K=2) + BN(affine)
    params += [lin(F2, F2), lin(F2, F2), jnp.zeros((1, F2), jnp.float32),
               jnp.ones((1, F2), jnp.float32), jnp.zeros((1, F2), jnp.float32)]
    # graphconvblock2: ChebConv(F2->output_size, K=2) + BN(affine)
    params += [lin(F2, output_size), lin(F2, output_size),
               jnp.zeros((1, output_size), jnp.float32),
               jnp.ones((1, output_size), jnp.float32),
               jnp.zeros((1, output_size), jnp.float32)]
    return params


def pack_params(raw, *, input_size, latent_size, style_dim, output_size):
    """Pack the 34 raw parameter arrays into 4 zero-padded, lane-aligned slabs."""
    F = input_size + latent_size
    WM = 2 * F
    WP = _round_up(max(WM, output_size), LANE)       # uniform lane-padded width
    L, S = latent_size, style_dim
    PBK = _round_up(L + S + 1, 8)                    # padded per-batch K dim
    const_row = L + S                                # row carrying the biases

    fc_p, gcn_p = raw[:24], raw[24:34]
    fc_dims = [(F, F), (F, F), (F, 2 * F), (2 * F, 2 * F)]

    w_mlp = jnp.zeros((4, WP, WP), jnp.float32)
    w_pb = jnp.zeros((PBK, 12 * WP), jnp.float32)
    w_gcn = jnp.zeros((2, WP, 2 * WP), jnp.float32)
    v_gcn = jnp.zeros((2, 3, WP), jnp.float32)

    for u, (fi, fo) in enumerate(fc_dims):
        W, b, swg, sbg, swb, sbb = fc_p[6 * u:6 * u + 6]
        if u == 0:
            # split fc1: x-rows stay on the node path; latent rows move to the
            # per-batch precompute (constant over nodes).
            w_mlp = w_mlp.at[0, :input_size, :fo].set(W[:input_size])
            w_pb = w_pb.at[:L, :fo].set(W[input_size:])
        else:
            w_mlp = w_mlp.at[u, :fi, :fo].set(W)
        add_c = u * WP
        g_c = (4 + 2 * u) * WP
        b_c = (5 + 2 * u) * WP
        w_pb = w_pb.at[const_row, add_c:add_c + fo].set(b[0])
        w_pb = w_pb.at[L:L + S, g_c:g_c + fo].set(swg)
        w_pb = w_pb.at[const_row, g_c:g_c + fo].set(sbg[0])
        w_pb = w_pb.at[L:L + S, b_c:b_c + fo].set(swb)
        w_pb = w_pb.at[const_row, b_c:b_c + fo].set(sbb[0])

    gcn_dims = [(2 * F, 2 * F), (2 * F, output_size)]
    for u, (fi, fo) in enumerate(gcn_dims):
        w0, w1, b, g, be = gcn_p[5 * u:5 * u + 5]
        w_gcn = w_gcn.at[u, :fi, :fo].set(w0)
        w_gcn = w_gcn.at[u, :fi, WP:WP + fo].set(w1)
        v_gcn = v_gcn.at[u, 0, :fo].set(b[0])
        v_gcn = v_gcn.at[u, 1, :fo].set(g[0])
        v_gcn = v_gcn.at[u, 2, :fo].set(be[0])

    # MXU operands in bf16; per-batch / norm parameters stay f32.
    return dict(w_mlp=w_mlp.astype(jnp.bfloat16), w_pb=w_pb,
                w_gcn=w_gcn.astype(jnp.bfloat16), v_gcn=v_gcn)


@functools.partial(jax.jit, static_argnames=("batch_size", "nroi", "output_size"))
def decoder5_forward(x, latent_vector, style_vector, edge_index, edge_attr,
                     packed, *, batch_size, nroi, output_size):
    B, N = batch_size, nroi
    w_mlp, w_pb = packed["w_mlp"], packed["w_pb"]
    w_gcn, v_gcn = packed["w_gcn"], packed["v_gcn"]
    WP = w_mlp.shape[-1]
    PBK = w_pb.shape[0]

    # node features, zero-padded to the uniform lane-dense kernel width
    x3 = x.reshape(B, N, x.shape[-1]).astype(jnp.float32)
    x_pad = jnp.pad(x3, ((0, 0), (0, 0), (0, WP - x3.shape[-1])))

    # per-batch vector feeding the fused precompute dot: [latent | style | 1]
    lat = latent_vector.astype(jnp.float32)
    sty = style_vector.astype(jnp.float32)
    zcat = jnp.concatenate([lat, sty, jnp.ones((B, 1), jnp.float32)], axis=-1)
    zcat = jnp.pad(zcat, ((0, 0), (0, PBK - zcat.shape[-1])))

    # dense per-graph adjacency straight from local indices (PyG-style
    # block-diagonal batching assumed: every edge stays inside its graph).
    src, dst = edge_index[0], edge_index[1]
    ea = edge_attr.reshape(-1).astype(jnp.float32)
    adj = jnp.zeros((B, N, N), jnp.float32).at[
        src // N, src % N, dst % N].add(ea)

    # ChebConv sym normalization D^-1/2 in f32 (graph preprocessing lives next
    # to the scatter build; the kernel gets bf16 adj for the MXU + half DMA).
    deg = jnp.sum(adj, axis=-1)
    dis = jnp.where(deg > 0, jax.lax.rsqrt(jnp.maximum(deg, 1e-12)), 0.0)
    dis = dis[..., None]                                     # (B, N, 1)
    adj_bf = adj.astype(jnp.bfloat16)

    inputs = [x_pad, zcat, adj_bf, dis, w_mlp, w_pb, w_gcn, v_gcn]

    def _nbytes(a):
        return int(a.size) * jnp.dtype(a.dtype).itemsize

    # explicit VMEM budget: inputs + output + worst-case live intermediates
    io_bytes = sum(_nbytes(a) for a in inputs) + B * N * WP * 4
    work_bytes = 10 * B * N * WP * 4 + 2 * B * N * N * 2
    vmem_limit = int(min(64 * 1024 * 1024,                    # v7x VMEM ceiling
                         max(16 * 1024 * 1024, io_bytes + work_bytes)))

    out = pl.pallas_call(
        decoder5_kernel,
        out_shape=jax.ShapeDtypeStruct((B, N, WP), jnp.float32),
        in_specs=[pl.BlockSpec(memory_space=pltpu.MemorySpace.VMEM)
                  for _ in inputs],
        out_specs=pl.BlockSpec(memory_space=pltpu.MemorySpace.VMEM),
        compiler_params=pltpu.CompilerParams(vmem_limit_bytes=vmem_limit),
    )(*inputs)
    # kernel emits a lane-dense slab; slice to the real output width outside.
    return out[:, :, :output_size]


if __name__ == "__main__":
    # small synthetic shapes
    batch_size = 2
    nroi = 16
    input_size = 4
    latent_size = 4
    style_dim = 8
    output_size = 4

    key = jax.random.PRNGKey(0)
    k_x, k_lat, k_sty, k_ea, k_p = jax.random.split(key, 5)

    x = jax.random.normal(k_x, (batch_size * nroi, input_size), jnp.float32)
    latent_vector = jax.random.normal(k_lat, (batch_size, latent_size),
                                      jnp.float32)
    style_vector = jax.random.normal(k_sty, (batch_size, style_dim),
                                     jnp.float32)

    # deterministic ring graph per sample (bidirectional edges), PyG-style
    # global node indexing over the batched block-diagonal graph.
    src, dst = [], []
    for b in range(batch_size):
        off = b * nroi
        for i in range(nroi):
            j = (i + 1) % nroi
            src += [off + i, off + j]
            dst += [off + j, off + i]
    edge_index = jnp.array([src, dst], dtype=jnp.int32)
    edge_attr = jax.random.uniform(k_ea, (edge_index.shape[1],),
                                   minval=0.5, maxval=1.5)

    raw_params = init_params(k_p, input_size, latent_size, style_dim,
                             output_size)
    packed = pack_params(raw_params, input_size=input_size,
                         latent_size=latent_size, style_dim=style_dim,
                         output_size=output_size)

    out = decoder5_forward(x, latent_vector, style_vector, edge_index,
                           edge_attr, packed,
                           batch_size=batch_size, nroi=nroi,
                           output_size=output_size)
    out = jax.block_until_ready(out)
    assert out.shape == (batch_size, nroi, output_size)
    assert bool(jnp.all(jnp.isfinite(out)))
    print("KERNEL_OK")
</pallas_src>

<mosaic_0001>
module attributes {stable_mosaic.version = 11 : i64} {
  func.func @decoder5_kernel(%arg0: memref<2x16x128xf32, #tpu.memory_space<vmem>>, %arg1: memref<2x16xf32, #tpu.memory_space<vmem>>, %arg2: memref<2x16x16xbf16, #tpu.memory_space<vmem>>, %arg3: memref<2x16x1xf32, #tpu.memory_space<vmem>>, %arg4: memref<4x128x128xbf16, #tpu.memory_space<vmem>>, %arg5: memref<16x1536xf32, #tpu.memory_space<vmem>>, %arg6: memref<2x128x256xbf16, #tpu.memory_space<vmem>>, %arg7: memref<2x3x128xf32, #tpu.memory_space<vmem>>, %arg8: memref<2x16x128xf32, #tpu.memory_space<vmem>>) attributes {dimension_semantics = [], scalar_prefetch = 0 : i64, scratch_operands = 0 : i64, tpu.core_type = #tpu.core_type<tc>} {
    %c0 = arith.constant 0 : index
    %c0_0 = arith.constant 0 : index
    %0 = vector.load %arg1[%c0, %c0_0] : memref<2x16xf32, #tpu.memory_space<vmem>>, vector<2x16xf32>
    %c0_1 = arith.constant 0 : index
    %c0_2 = arith.constant 0 : index
    %1 = vector.load %arg5[%c0_1, %c0_2] : memref<16x1536xf32, #tpu.memory_space<vmem>>, vector<16x1536xf32>
    %cst = arith.constant dense<0.000000e+00> : vector<2x1536xf32>
    %2 = tpu.matmul %0, %1, %cst {dimension_numbers = #tpu.dot_dimension_numbers<[1], [0], [0], [1], [0, 0, 1, 1], [], []>} : vector<2x16xf32>, vector<16x1536xf32>, vector<2x1536xf32> -> vector<2x1536xf32>
    %c0_3 = arith.constant 0 : index
    %c0_4 = arith.constant 0 : index
    %c0_5 = arith.constant 0 : index
    %3 = vector.load %arg0[%c0_3, %c0_4, %c0_5] : memref<2x16x128xf32, #tpu.memory_space<vmem>>, vector<2x16x128xf32>
    %4 = vector.shape_cast %3 : vector<2x16x128xf32> to vector<32x128xf32>
    %5 = arith.truncf %4 : vector<32x128xf32> to vector<32x128xbf16>
    %c0_6 = arith.constant 0 : index
    %c0_7 = arith.constant 0 : index
    %c0_8 = arith.constant 0 : index
    %6 = vector.load %arg4[%c0_6, %c0_7, %c0_8] : memref<4x128x128xbf16, #tpu.memory_space<vmem>>, vector<1x128x128xbf16>
    %7 = vector.shape_cast %6 : vector<1x128x128xbf16> to vector<128x128xbf16>
    %cst_9 = arith.constant dense<0.000000e+00> : vector<32x128xf32>
    %8 = tpu.matmul %5, %7, %cst_9 {dimension_numbers = #tpu.dot_dimension_numbers<[1], [0], [0], [1], [0, 0, 1, 1], [], []>} : vector<32x128xbf16>, vector<128x128xbf16>, vector<32x128xf32> -> vector<32x128xf32>
    %9 = vector.shape_cast %8 : vector<32x128xf32> to vector<2x16x128xf32>
    %10 = vector.extract_strided_slice %2 {offsets = [0, 0], sizes = [2, 128], strides = [1, 1]} : vector<2x1536xf32> to vector<2x128xf32>
    %11 = vector.shape_cast %10 : vector<2x128xf32> to vector<2x1x128xf32>
    %12 = vector.broadcast %11 : vector<2x1x128xf32> to vector<2x16x128xf32>
    %13 = arith.addf %9, %12 : vector<2x16x128xf32>
    %cst_10 = arith.constant dense<0.000000e+00> : vector<2x128xf32>
    %14 = vector.multi_reduction <add>, %13, %cst_10 [1] : vector<2x16x128xf32> to vector<2x128xf32>
    %15 = vector.shape_cast %14 : vector<2x128xf32> to vector<2x1x128xf32>
    %cst_11 = arith.constant 1.600000e+01 : f32
    %16 = vector.broadcast %cst_11 : f32 to vector<2x1x128xf32>
    %17 = arith.divf %15, %16 : vector<2x1x128xf32>
    %18 = arith.mulf %13, %13 : vector<2x16x128xf32>
    %cst_12 = arith.constant dense<0.000000e+00> : vector<2x128xf32>
    %19 = vector.multi_reduction <add>, %18, %cst_12 [1] : vector<2x16x128xf32> to vector<2x128xf32>
    %20 = vector.shape_cast %19 : vector<2x128xf32> to vector<2x1x128xf32>
    %cst_13 = arith.constant 1.600000e+01 : f32
    %21 = vector.broadcast %cst_13 : f32 to vector<2x1x128xf32>
    %22 = arith.divf %20, %21 : vector<2x1x128xf32>
    %23 = arith.mulf %17, %17 : vector<2x1x128xf32>
    %24 = arith.subf %22, %23 : vector<2x1x128xf32>
    %cst_14 = arith.constant 0.000000e+00 : f32
    %25 = vector.broadcast %cst_14 : f32 to vector<2x1x128xf32>
    %26 = arith.maximumf %24, %25 : vector<2x1x128xf32>
    %27 = vector.broadcast %17 : vector<2x1x128xf32> to vector<2x16x128xf32>
    %28 = arith.subf %13, %27 : vector<2x16x128xf32>
    %cst_15 = arith.constant 9.99999974E-6 : f32
    %29 = vector.broadcast %cst_15 : f32 to vector<2x1x128xf32>
    %30 = arith.addf %26, %29 : vector<2x1x128xf32>
    %31 = math.rsqrt %30 : vector<2x1x128xf32>
    %32 = vector.broadcast %31 : vector<2x1x128xf32> to vector<2x16x128xf32>
    %33 = arith.mulf %28, %32 : vector<2x16x128xf32>
    %34 = vector.extract_strided_slice %2 {offsets = [0, 512], sizes = [2, 128], strides = [1, 1]} : vector<2x1536xf32> to vector<2x128xf32>
    %35 = vector.shape_cast %34 : vector<2x128xf32> to vector<2x1x128xf32>
    %36 = vector.extract_strided_slice %2 {offsets = [0, 640], sizes = [2, 128], strides = [1, 1]} : vector<2x1536xf32> to vector<2x128xf32>
    %37 = vector.shape_cast %36 : vector<2x128xf32> to vector<2x1x128xf32>
    %cst_16 = arith.constant 1.000000e+00 : f32
    %38 = vector.broadcast %cst_16 : f32 to vector<2x1x128xf32>
    %39 = arith.addf %38, %35 : vector<2x1x128xf32>
    %40 = vector.broadcast %39 : vector<2x1x128xf32> to vector<2x16x128xf32>
    %41 = arith.mulf %33, %40 : vector<2x16x128xf32>
    %42 = vector.broadcast %37 : vector<2x1x128xf32> to vector<2x16x128xf32>
    %43 = arith.addf %41, %42 : vector<2x16x128xf32>
    %cst_17 = arith.constant 0.000000e+00 : f32
    %44 = vector.broadcast %cst_17 : f32 to vector<2x16x128xf32>
    %45 = arith.cmpf oge, %43, %44 : vector<2x16x128xf32>
    %cst_18 = arith.constant 2.000000e-01 : f32
    %46 = vector.broadcast %cst_18 : f32 to vector<2x16x128xf32>
    %47 = arith.mulf %46, %43 : vector<2x16x128xf32>
    %48 = arith.select %45, %43, %47 : vector<2x16x128xi1>, vector<2x16x128xf32>
    %49 = vector.shape_cast %48 : vector<2x16x128xf32> to vector<32x128xf32>
    %50 = arith.truncf %49 : vector<32x128xf32> to vector<32x128xbf16>
    %c1 = arith.constant 1 : index
    %c0_19 = arith.constant 0 : index
    %c0_20 = arith.constant 0 : index
    %51 = vector.load %arg4[%c1, %c0_19, %c0_20] : memref<4x128x128xbf16, #tpu.memory_space<vmem>>, vector<1x128x128xbf16>
    %52 = vector.shape_cast %51 : vector<1x128x128xbf16> to vector<128x128xbf16>
    %cst_21 = arith.constant dense<0.000000e+00> : vector<32x128xf32>
    %53 = tpu.matmul %50, %52, %cst_21 {dimension_numbers = #tpu.dot_dimension_numbers<[1], [0], [0], [1], [0, 0, 1, 1], [], []>} : vector<32x128xbf16>, vector<128x128xbf16>, vector<32x128xf32> -> vector<32x128xf32>
    %54 = vector.shape_cast %53 : vector<32x128xf32> to vector<2x16x128xf32>
    %55 = vector.extract_strided_slice %2 {offsets = [0, 128], sizes = [2, 128], strides = [1, 1]} : vector<2x1536xf32> to vector<2x128xf32>
    %56 = vector.shape_cast %55 : vector<2x128xf32> to vector<2x1x128xf32>
    %57 = vector.broadcast %56 : vector<2x1x128xf32> to vector<2x16x128xf32>
    %58 = arith.addf %54, %57 : vector<2x16x128xf32>
    %cst_22 = arith.constant dense<0.000000e+00> : vector<2x128xf32>
    %59 = vector.multi_reduction <add>, %58, %cst_22 [1] : vector<2x16x128xf32> to vector<2x128xf32>
    %60 = vector.shape_cast %59 : vector<2x128xf32> to vector<2x1x128xf32>
    %cst_23 = arith.constant 1.600000e+01 : f32
    %61 = vector.broadcast %cst_23 : f32 to vector<2x1x128xf32>
    %62 = arith.divf %60, %61 : vector<2x1x128xf32>
    %63 = arith.mulf %58, %58 : vector<2x16x128xf32>
    %cst_24 = arith.constant dense<0.000000e+00> : vector<2x128xf32>
    %64 = vector.multi_reduction <add>, %63, %cst_24 [1] : vector<2x16x128xf32> to vector<2x128xf32>
    %65 = vector.shape_cast %64 : vector<2x128xf32> to vector<2x1x128xf32>
    %cst_25 = arith.constant 1.600000e+01 : f32
    %66 = vector.broadcast %cst_25 : f32 to vector<2x1x128xf32>
    %67 = arith.divf %65, %66 : vector<2x1x128xf32>
    %68 = arith.mulf %62, %62 : vector<2x1x128xf32>
    %69 = arith.subf %67, %68 : vector<2x1x128xf32>
    %cst_26 = arith.constant 0.000000e+00 : f32
    %70 = vector.broadcast %cst_26 : f32 to vector<2x1x128xf32>
    %71 = arith.maximumf %69, %70 : vector<2x1x128xf32>
    %72 = vector.broadcast %62 : vector<2x1x128xf32> to vector<2x16x128xf32>
    %73 = arith.subf %58, %72 : vector<2x16x128xf32>
    %cst_27 = arith.constant 9.99999974E-6 : f32
    %74 = vector.broadcast %cst_27 : f32 to vector<2x1x128xf32>
    %75 = arith.addf %71, %74 : vector<2x1x128xf32>
    %76 = math.rsqrt %75 : vector<2x1x128xf32>
    %77 = vector.broadcast %76 : vector<2x1x128xf32> to vector<2x16x128xf32>
    %78 = arith.mulf %73, %77 : vector<2x16x128xf32>
    %79 = vector.extract_strided_slice %2 {offsets = [0, 768], sizes = [2, 128], strides = [1, 1]} : vector<2x1536xf32> to vector<2x128xf32>
    %80 = vector.shape_cast %79 : vector<2x128xf32> to vector<2x1x128xf32>
    %81 = vector.extract_strided_slice %2 {offsets = [0, 896], sizes = [2, 128], strides = [1, 1]} : vector<2x1536xf32> to vector<2x128xf32>
    %82 = vector.shape_cast %81 : vector<2x128xf32> to vector<2x1x128xf32>
    %cst_28 = arith.constant 1.000000e+00 : f32
    %83 = vector.broadcast %cst_28 : f32 to vector<2x1x128xf32>
    %84 = arith.addf %83, %80 : vector<2x1x128xf32>
    %85 = vector.broadcast %84 : vector<2x1x128xf32> to vector<2x16x128xf32>
    %86 = arith.mulf %78, %85 : vector<2x16x128xf32>
    %87 = vector.broadcast %82 : vector<2x1x128xf32> to vector<2x16x128xf32>
    %88 = arith.addf %86, %87 : vector<2x16x128xf32>
    %cst_29 = arith.constant 0.000000e+00 : f32
    %89 = vector.broadcast %cst_29 : f32 to vector<2x16x128xf32>
    %90 = arith.cmpf oge, %88, %89 : vector<2x16x128xf32>
    %cst_30 = arith.constant 2.000000e-01 : f32
    %91 = vector.broadcast %cst_30 : f32 to vector<2x16x128xf32>
    %92 = arith.mulf %91, %88 : vector<2x16x128xf32>
    %93 = arith.select %90, %88, %92 : vector<2x16x128xi1>, vector<2x16x128xf32>
    %94 = vector.shape_cast %93 : vector<2x16x128xf32> to vector<32x128xf32>
    %95 = arith.truncf %94 : vector<32x128xf32> to vector<32x128xbf16>
    %c2 = arith.constant 2 : index
    %c0_31 = arith.constant 0 : index
    %c0_32 = arith.constant 0 : index
    %96 = vector.load %arg4[%c2, %c0_31, %c0_32] : memref<4x128x128xbf16, #tpu.memory_space<vmem>>, vector<1x128x128xbf16>
    %97 = vector.shape_cast %96 : vector<1x128x128xbf16> to vector<128x128xbf16>
    %cst_33 = arith.constant dense<0.000000e+00> : vector<32x128xf32>
    %98 = tpu.matmul %95, %97, %cst_33 {dimension_numbers = #tpu.dot_dimension_numbers<[1], [0], [0], [1], [0, 0, 1, 1], [], []>} : vector<32x128xbf16>, vector<128x128xbf16>, vector<32x128xf32> -> vector<32x128xf32>
    %99 = vector.shape_cast %98 : vector<32x128xf32> to vector<2x16x128xf32>
    %100 = vector.extract_strided_slice %2 {offsets = [0, 256], sizes = [2, 128], strides = [1, 1]} : vector<2x1536xf32> to vector<2x128xf32>
    %101 = vector.shape_cast %100 : vector<2x128xf32> to vector<2x1x128xf32>
    %102 = vector.broadcast %101 : vector<2x1x128xf32> to vector<2x16x128xf32>
    %103 = arith.addf %99, %102 : vector<2x16x128xf32>
    %cst_34 = arith.constant dense<0.000000e+00> : vector<2x128xf32>
    %104 = vector.multi_reduction <add>, %103, %cst_34 [1] : vector<2x16x128xf32> to vector<2x128xf32>
    %105 = vector.shape_cast %104 : vector<2x128xf32> to vector<2x1x128xf32>
    %cst_35 = arith.constant 1.600000e+01 : f32
    %106 = vector.broadcast %cst_35 : f32 to vector<2x1x128xf32>
    %107 = arith.divf %105, %106 : vector<2x1x128xf32>
    %108 = arith.mulf %103, %103 : vector<2x16x128xf32>
    %cst_36 = arith.constant dense<0.000000e+00> : vector<2x128xf32>
    %109 = vector.multi_reduction <add>, %108, %cst_36 [1] : vector<2x16x128xf32> to vector<2x128xf32>
    %110 = vector.shape_cast %109 : vector<2x128xf32> to vector<2x1x128xf32>
    %cst_37 = arith.constant 1.600000e+01 : f32
    %111 = vector.broadcast %cst_37 : f32 to vector<2x1x128xf32>
    %112 = arith.divf %110, %111 : vector<2x1x128xf32>
    %113 = arith.mulf %107, %107 : vector<2x1x128xf32>
    %114 = arith.subf %112, %113 : vector<2x1x128xf32>
    %cst_38 = arith.constant 0.000000e+00 : f32
    %115 = vector.broadcast %cst_38 : f32 to vector<2x1x128xf32>
    %116 = arith.maximumf %114, %115 : vector<2x1x128xf32>
    %117 = vector.broadcast %107 : vector<2x1x128xf32> to vector<2x16x128xf32>
    %118 = arith.subf %103, %117 : vector<2x16x128xf32>
    %cst_39 = arith.constant 9.99999974E-6 : f32
    %119 = vector.broadcast %cst_39 : f32 to vector<2x1x128xf32>
    %120 = arith.addf %116, %119 : vector<2x1x128xf32>
    %121 = math.rsqrt %120 : vector<2x1x128xf32>
    %122 = vector.broadcast %121 : vector<2x1x128xf32> to vector<2x16x128xf32>
    %123 = arith.mulf %118, %122 : vector<2x16x128xf32>
    %124 = vector.extract_strided_slice %2 {offsets = [0, 1024], sizes = [2, 128], strides = [1, 1]} : vector<2x1536xf32> to vector<2x128xf32>
    %125 = vector.shape_cast %124 : vector<2x128xf32> to vector<2x1x128xf32>
    %126 = vector.extract_strided_slice %2 {offsets = [0, 1152], sizes = [2, 128], strides = [1, 1]} : vector<2x1536xf32> to vector<2x128xf32>
    %127 = vector.shape_cast %126 : vector<2x128xf32> to vector<2x1x128xf32>
    %cst_40 = arith.constant 1.000000e+00 : f32
    %128 = vector.broadcast %cst_40 : f32 to vector<2x1x128xf32>
    %129 = arith.addf %128, %125 : vector<2x1x128xf32>
    %130 = vector.broadcast %129 : vector<2x1x128xf32> to vector<2x16x128xf32>
    %131 = arith.mulf %123, %130 : vector<2x16x128xf32>
    %132 = vector.broadcast %127 : vector<2x1x128xf32> to vector<2x16x128xf32>
    %133 = arith.addf %131, %132 : vector<2x16x128xf32>
    %cst_41 = arith.constant 0.000000e+00 : f32
    %134 = vector.broadcast %cst_41 : f32 to vector<2x16x128xf32>
    %135 = arith.cmpf oge, %133, %134 : vector<2x16x128xf32>
    %cst_42 = arith.constant 2.000000e-01 : f32
    %136 = vector.broadcast %cst_42 : f32 to vector<2x16x128xf32>
    %137 = arith.mulf %136, %133 : vector<2x16x128xf32>
    %138 = arith.select %135, %133, %137 : vector<2x16x128xi1>, vector<2x16x128xf32>
    %139 = vector.shape_cast %138 : vector<2x16x128xf32> to vector<32x128xf32>
    %140 = arith.truncf %139 : vector<32x128xf32> to vector<32x128xbf16>
    %c3 = arith.constant 3 : index
    %c0_43 = arith.constant 0 : index
    %c0_44 = arith.constant 0 : index
    %141 = vector.load %arg4[%c3, %c0_43, %c0_44] : memref<4x128x128xbf16, #tpu.memory_space<vmem>>, vector<1x128x128xbf16>
    %142 = vector.shape_cast %141 : vector<1x128x128xbf16> to vector<128x128xbf16>
    %cst_45 = arith.constant dense<0.000000e+00> : vector<32x128xf32>
    %143 = tpu.matmul %140, %142, %cst_45 {dimension_numbers = #tpu.dot_dimension_numbers<[1], [0], [0], [1], [0, 0, 1, 1], [], []>} : vector<32x128xbf16>, vector<128x128xbf16>, vector<32x128xf32> -> vector<32x128xf32>
    %144 = vector.shape_cast %143 : vector<32x128xf32> to vector<2x16x128xf32>
    %145 = vector.extract_strided_slice %2 {offsets = [0, 384], sizes = [2, 128], strides = [1, 1]} : vector<2x1536xf32> to vector<2x128xf32>
    %146 = vector.shape_cast %145 : vector<2x128xf32> to vector<2x1x128xf32>
    %147 = vector.broadcast %146 : vector<2x1x128xf32> to vector<2x16x128xf32>
    %148 = arith.addf %144, %147 : vector<2x16x128xf32>
    %cst_46 = arith.constant dense<0.000000e+00> : vector<2x128xf32>
    %149 = vector.multi_reduction <add>, %148, %cst_46 [1] : vector<2x16x128xf32> to vector<2x128xf32>
    %150 = vector.shape_cast %149 : vector<2x128xf32> to vector<2x1x128xf32>
    %cst_47 = arith.constant 1.600000e+01 : f32
    %151 = vector.broadcast %cst_47 : f32 to vector<2x1x128xf32>
    %152 = arith.divf %150, %151 : vector<2x1x128xf32>
    %153 = arith.mulf %148, %148 : vector<2x16x128xf32>
    %cst_48 = arith.constant dense<0.000000e+00> : vector<2x128xf32>
    %154 = vector.multi_reduction <add>, %153, %cst_48 [1] : vector<2x16x128xf32> to vector<2x128xf32>
    %155 = vector.shape_cast %154 : vector<2x128xf32> to vector<2x1x128xf32>
    %cst_49 = arith.constant 1.600000e+01 : f32
    %156 = vector.broadcast %cst_49 : f32 to vector<2x1x128xf32>
    %157 = arith.divf %155, %156 : vector<2x1x128xf32>
    %158 = arith.mulf %152, %152 : vector<2x1x128xf32>
    %159 = arith.subf %157, %158 : vector<2x1x128xf32>
    %cst_50 = arith.constant 0.000000e+00 : f32
    %160 = vector.broadcast %cst_50 : f32 to vector<2x1x128xf32>
    %161 = arith.maximumf %159, %160 : vector<2x1x128xf32>
    %162 = vector.broadcast %152 : vector<2x1x128xf32> to vector<2x16x128xf32>
    %163 = arith.subf %148, %162 : vector<2x16x128xf32>
    %cst_51 = arith.constant 9.99999974E-6 : f32
    %164 = vector.broadcast %cst_51 : f32 to vector<2x1x128xf32>
    %165 = arith.addf %161, %164 : vector<2x1x128xf32>
    %166 = math.rsqrt %165 : vector<2x1x128xf32>
    %167 = vector.broadcast %166 : vector<2x1x128xf32> to vector<2x16x128xf32>
    %168 = arith.mulf %163, %167 : vector<2x16x128xf32>
    %169 = vector.extract_strided_slice %2 {offsets = [0, 1280], sizes = [2, 128], strides = [1, 1]} : vector<2x1536xf32> to vector<2x128xf32>
    %170 = vector.shape_cast %169 : vector<2x128xf32> to vector<2x1x128xf32>
    %171 = vector.extract_strided_slice %2 {offsets = [0, 1408], sizes = [2, 128], strides = [1, 1]} : vector<2x1536xf32> to vector<2x128xf32>
    %172 = vector.shape_cast %171 : vector<2x128xf32> to vector<2x1x128xf32>
    %cst_52 = arith.constant 1.000000e+00 : f32
    %173 = vector.broadcast %cst_52 : f32 to vector<2x1x128xf32>
    %174 = arith.addf %173, %170 : vector<2x1x128xf32>
    %175 = vector.broadcast %174 : vector<2x1x128xf32> to vector<2x16x128xf32>
    %176 = arith.mulf %168, %175 : vector<2x16x128xf32>
    %177 = vector.broadcast %172 : vector<2x1x128xf32> to vector<2x16x128xf32>
    %178 = arith.addf %176, %177 : vector<2x16x128xf32>
    %cst_53 = arith.constant 0.000000e+00 : f32
    %179 = vector.broadcast %cst_53 : f32 to vector<2x16x128xf32>
    %180 = arith.cmpf oge, %178, %179 : vector<2x16x128xf32>
    %cst_54 = arith.constant 2.000000e-01 : f32
    %181 = vector.broadcast %cst_54 : f32 to vector<2x16x128xf32>
    %182 = arith.mulf %181, %178 : vector<2x16x128xf32>
    %183 = arith.select %180, %178, %182 : vector<2x16x128xi1>, vector<2x16x128xf32>
    %184 = vector.shape_cast %183 : vector<2x16x128xf32> to vector<32x128xf32>
    %c0_55 = arith.constant 0 : index
    %c0_56 = arith.constant 0 : index
    %c0_57 = arith.constant 0 : index
    %185 = vector.load %arg2[%c0_55, %c0_56, %c0_57] : memref<2x16x16xbf16, #tpu.memory_space<vmem>>, vector<2x16x16xbf16>
    %c0_58 = arith.constant 0 : index
    %c0_59 = arith.constant 0 : index
    %c0_60 = arith.constant 0 : index
    %186 = vector.load %arg3[%c0_58, %c0_59, %c0_60] : memref<2x16x1xf32, #tpu.memory_space<vmem>>, vector<2x16x1xf32>
    %c0_61 = arith.constant 0 : index
    %c0_62 = arith.constant 0 : index
    %c0_63 = arith.constant 0 : index
    %187 = vector.load %arg7[%c0_61, %c0_62, %c0_63] : memref<2x3x128xf32, #tpu.memory_space<vmem>>, vector<1x3x128xf32>
    %188 = vector.shape_cast %187 : vector<1x3x128xf32> to vector<3x128xf32>
    %189 = arith.truncf %184 : vector<32x128xf32> to vector<32x128xbf16>
    %c0_64 = arith.constant 0 : index
    %c0_65 = arith.constant 0 : index
    %c0_66 = arith.constant 0 : index
    %190 = vector.load %arg6[%c0_64, %c0_65, %c0_66] : memref<2x128x256xbf16, #tpu.memory_space<vmem>>, vector<1x128x256xbf16>
    %191 = vector.shape_cast %190 : vector<1x128x256xbf16> to vector<128x256xbf16>
    %cst_67 = arith.constant dense<0.000000e+00> : vector<32x256xf32>
    %192 = tpu.matmul %189, %191, %cst_67 {dimension_numbers = #tpu.dot_dimension_numbers<[1], [0], [0], [1], [0, 0, 1, 1], [], []>} : vector<32x128xbf16>, vector<128x256xbf16>, vector<32x256xf32> -> vector<32x256xf32>
    %193 = vector.shape_cast %192 : vector<32x256xf32> to vector<2x16x256xf32>
    %194 = vector.extract_strided_slice %193 {offsets = [0, 0, 128], sizes = [2, 16, 128], strides = [1, 1, 1]} : vector<2x16x256xf32> to vector<2x16x128xf32>
    %195 = vector.broadcast %186 : vector<2x16x1xf32> to vector<2x16x128xf32>
    %196 = arith.mulf %194, %195 : vector<2x16x128xf32>
    %197 = arith.truncf %196 : vector<2x16x128xf32> to vector<2x16x128xbf16>
    %198 = vector.extract_strided_slice %193 {offsets = [0, 0, 0], sizes = [2, 16, 128], strides = [1, 1, 1]} : vector<2x16x256xf32> to vector<2x16x128xf32>
    "tpu.trace_start"() <{level = 10 : i32, message = "bmn,bno->bmo"}> : () -> ()
    %cst_68 = arith.constant dense<0.000000e+00> : vector<2x16x128xf32>
    %199 = tpu.matmul %185, %197, %cst_68 {dimension_numbers = #tpu.dot_dimension_numbers<[2], [1], [1], [2], [0, 0, 0, 1, 1, 2], [0], [0]>} : vector<2x16x16xbf16>, vector<2x16x128xbf16>, vector<2x16x128xf32> -> vector<2x16x128xf32>
    "tpu.trace_stop"() : () -> ()
    %200 = vector.broadcast %186 : vector<2x16x1xf32> to vector<2x16x128xf32>
    %201 = arith.mulf %200, %199 : vector<2x16x128xf32>
    %202 = arith.subf %198, %201 : vector<2x16x128xf32>
    %203 = vector.shape_cast %202 : vector<2x16x128xf32> to vector<32x128xf32>
    %204 = vector.extract_strided_slice %188 {offsets = [0, 0], sizes = [1, 128], strides = [1, 1]} : vector<3x128xf32> to vector<1x128xf32>
    %205 = vector.broadcast %204 : vector<1x128xf32> to vector<32x128xf32>
    %206 = arith.addf %203, %205 : vector<32x128xf32>
    %cst_69 = arith.constant dense<0.000000e+00> : vector<128xf32>
    %207 = vector.multi_reduction <add>, %206, %cst_69 [0] : vector<32x128xf32> to vector<128xf32>
    %208 = vector.shape_cast %207 : vector<128xf32> to vector<1x128xf32>
    %cst_70 = arith.constant 3.200000e+01 : f32
    %209 = vector.broadcast %cst_70 : f32 to vector<1x128xf32>
    %210 = arith.divf %208, %209 : vector<1x128xf32>
    %211 = arith.mulf %206, %206 : vector<32x128xf32>
    %cst_71 = arith.constant dense<0.000000e+00> : vector<128xf32>
    %212 = vector.multi_reduction <add>, %211, %cst_71 [0] : vector<32x128xf32> to vector<128xf32>
    %213 = vector.shape_cast %212 : vector<128xf32> to vector<1x128xf32>
    %cst_72 = arith.constant 3.200000e+01 : f32
    %214 = vector.broadcast %cst_72 : f32 to vector<1x128xf32>
    %215 = arith.divf %213, %214 : vector<1x128xf32>
    %216 = arith.mulf %210, %210 : vector<1x128xf32>
    %217 = arith.subf %215, %216 : vector<1x128xf32>
    %cst_73 = arith.constant 0.000000e+00 : f32
    %218 = vector.broadcast %cst_73 : f32 to vector<1x128xf32>
    %219 = arith.maximumf %217, %218 : vector<1x128xf32>
    %220 = vector.broadcast %210 : vector<1x128xf32> to vector<32x128xf32>
    %221 = arith.subf %206, %220 : vector<32x128xf32>
    %cst_74 = arith.constant 9.99999974E-6 : f32
    %222 = vector.broadcast %cst_74 : f32 to vector<1x128xf32>
    %223 = arith.addf %219, %222 : vector<1x128xf32>
    %224 = math.rsqrt %223 : vector<1x128xf32>
    %225 = vector.broadcast %224 : vector<1x128xf32> to vector<32x128xf32>
    %226 = arith.mulf %221, %225 : vector<32x128xf32>
    %227 = vector.extract_strided_slice %188 {offsets = [1, 0], sizes = [1, 128], strides = [1, 1]} : vector<3x128xf32> to vector<1x128xf32>
    %228 = vector.broadcast %227 : vector<1x128xf32> to vector<32x128xf32>
    %229 = arith.mulf %226, %228 : vector<32x128xf32>
    %230 = vector.extract_strided_slice %188 {offsets = [2, 0], sizes = [1, 128], strides = [1, 1]} : vector<3x128xf32> to vector<1x128xf32>
    %231 = vector.broadcast %230 : vector<1x128xf32> to vector<32x128xf32>
    %232 = arith.addf %229, %231 : vector<32x128xf32>
    %cst_75 = arith.constant 0.000000e+00 : f32
    %233 = vector.broadcast %cst_75 : f32 to vector<32x128xf32>
    %234 = arith.cmpf oge, %232, %233 : vector<32x128xf32>
    %cst_76 = arith.constant 2.000000e-01 : f32
    %235 = vector.broadcast %cst_76 : f32 to vector<32x128xf32>
    %236 = arith.mulf %235, %232 : vector<32x128xf32>
    %237 = arith.select %234, %232, %236 : vector<32x128xi1>, vector<32x128xf32>
    %c1_77 = arith.constant 1 : index
    %c0_78 = arith.constant 0 : index
    %c0_79 = arith.constant 0 : index
    %238 = vector.load %arg7[%c1_77, %c0_78, %c0_79] : memref<2x3x128xf32, #tpu.memory_space<vmem>>, vector<1x3x128xf32>
    %239 = vector.shape_cast %238 : vector<1x3x128xf32> to vector<3x128xf32>
    %240 = arith.truncf %237 : vector<32x128xf32> to vector<32x128xbf16>
    %c1_80 = arith.constant 1 : index
    %c0_81 = arith.constant 0 : index
    %c0_82 = arith.constant 0 : index
    %241 = vector.load %arg6[%c1_80, %c0_81, %c0_82] : memref<2x128x256xbf16, #tpu.memory_space<vmem>>, vector<1x128x256xbf16>
    %242 = vector.shape_cast %241 : vector<1x128x256xbf16> to vector<128x256xbf16>
    %cst_83 = arith.constant dense<0.000000e+00> : vector<32x256xf32>
    %243 = tpu.matmul %240, %242, %cst_83 {dimension_numbers = #tpu.dot_dimension_numbers<[1], [0], [0], [1], [0, 0, 1, 1], [], []>} : vector<32x128xbf16>, vector<128x256xbf16>, vector<32x256xf32> -> vector<32x256xf32>
    %244 = vector.shape_cast %243 : vector<32x256xf32> to vector<2x16x256xf32>
    %245 = vector.extract_strided_slice %244 {offsets = [0, 0, 128], sizes = [2, 16, 128], strides = [1, 1, 1]} : vector<2x16x256xf32> to vector<2x16x128xf32>
    %246 = vector.broadcast %186 : vector<2x16x1xf32> to vector<2x16x128xf32>
    %247 = arith.mulf %245, %246 : vector<2x16x128xf32>
    %248 = arith.truncf %247 : vector<2x16x128xf32> to vector<2x16x128xbf16>
    %249 = vector.extract_strided_slice %244 {offsets = [0, 0, 0], sizes = [2, 16, 128], strides = [1, 1, 1]} : vector<2x16x256xf32> to vector<2x16x128xf32>
    "tpu.trace_start"() <{level = 10 : i32, message = "bmn,bno->bmo"}> : () -> ()
    %cst_84 = arith.constant dense<0.000000e+00> : vector<2x16x128xf32>
    %250 = tpu.matmul %185, %248, %cst_84 {dimension_numbers = #tpu.dot_dimension_numbers<[2], [1], [1], [2], [0, 0, 0, 1, 1, 2], [0], [0]>} : vector<2x16x16xbf16>, vector<2x16x128xbf16>, vector<2x16x128xf32> -> vector<2x16x128xf32>
    "tpu.trace_stop"() : () -> ()
    %251 = vector.broadcast %186 : vector<2x16x1xf32> to vector<2x16x128xf32>
    %252 = arith.mulf %251, %250 : vector<2x16x128xf32>
    %253 = arith.subf %249, %252 : vector<2x16x128xf32>
    %254 = vector.shape_cast %253 : vector<2x16x128xf32> to vector<32x128xf32>
    %255 = vector.extract_strided_slice %239 {offsets = [0, 0], sizes = [1, 128], strides = [1, 1]} : vector<3x128xf32> to vector<1x128xf32>
    %256 = vector.broadcast %255 : vector<1x128xf32> to vector<32x128xf32>
    %257 = arith.addf %254, %256 : vector<32x128xf32>
    %cst_85 = arith.constant dense<0.000000e+00> : vector<128xf32>
    %258 = vector.multi_reduction <add>, %257, %cst_85 [0] : vector<32x128xf32> to vector<128xf32>
    %259 = vector.shape_cast %258 : vector<128xf32> to vector<1x128xf32>
    %cst_86 = arith.constant 3.200000e+01 : f32
    %260 = vector.broadcast %cst_86 : f32 to vector<1x128xf32>
    %261 = arith.divf %259, %260 : vector<1x128xf32>
    %262 = arith.mulf %257, %257 : vector<32x128xf32>
    %cst_87 = arith.constant dense<0.000000e+00> : vector<128xf32>
    %263 = vector.multi_reduction <add>, %262, %cst_87 [0] : vector<32x128xf32> to vector<128xf32>
    %264 = vector.shape_cast %263 : vector<128xf32> to vector<1x128xf32>
    %cst_88 = arith.constant 3.200000e+01 : f32
    %265 = vector.broadcast %cst_88 : f32 to vector<1x128xf32>
    %266 = arith.divf %264, %265 : vector<1x128xf32>
    %267 = arith.mulf %261, %261 : vector<1x128xf32>
    %268 = arith.subf %266, %267 : vector<1x128xf32>
    %cst_89 = arith.constant 0.000000e+00 : f32
    %269 = vector.broadcast %cst_89 : f32 to vector<1x128xf32>
    %270 = arith.maximumf %268, %269 : vector<1x128xf32>
    %271 = vector.broadcast %261 : vector<1x128xf32> to vector<32x128xf32>
    %272 = arith.subf %257, %271 : vector<32x128xf32>
    %cst_90 = arith.constant 9.99999974E-6 : f32
    %273 = vector.broadcast %cst_90 : f32 to vector<1x128xf32>
    %274 = arith.addf %270, %273 : vector<1x128xf32>
    %275 = math.rsqrt %274 : vector<1x128xf32>
    %276 = vector.broadcast %275 : vector<1x128xf32> to vector<32x128xf32>
    %277 = arith.mulf %272, %276 : vector<32x128xf32>
    %278 = vector.extract_strided_slice %239 {offsets = [1, 0], sizes = [1, 128], strides = [1, 1]} : vector<3x128xf32> to vector<1x128xf32>
    %279 = vector.broadcast %278 : vector<1x128xf32> to vector<32x128xf32>
    %280 = arith.mulf %277, %279 : vector<32x128xf32>
    %281 = vector.extract_strided_slice %239 {offsets = [2, 0], sizes = [1, 128], strides = [1, 1]} : vector<3x128xf32> to vector<1x128xf32>
    %282 = vector.broadcast %281 : vector<1x128xf32> to vector<32x128xf32>
    %283 = arith.addf %280, %282 : vector<32x128xf32>
    %cst_91 = arith.constant 0.000000e+00 : f32
    %284 = vector.broadcast %cst_91 : f32 to vector<32x128xf32>
    %285 = arith.cmpf oge, %283, %284 : vector<32x128xf32>
    %cst_92 = arith.constant 2.000000e-01 : f32
    %286 = vector.broadcast %cst_92 : f32 to vector<32x128xf32>
    %287 = arith.mulf %286, %283 : vector<32x128xf32>
    %288 = arith.select %285, %283, %287 : vector<32x128xi1>, vector<32x128xf32>
    %289 = vector.shape_cast %288 : vector<32x128xf32> to vector<2x16x128xf32>
    %c0_93 = arith.constant 0 : index
    %c0_94 = arith.constant 0 : index
    %c0_95 = arith.constant 0 : index
    %290 = vector.load %arg8[%c0_93, %c0_94, %c0_95] : memref<2x16x128xf32, #tpu.memory_space<vmem>>, vector<2x16x128xf32>
    tpu.vector_store %arg8[%c0_93, %c0_94, %c0_95], %289 {strides = array<i32>} : memref<2x16x128xf32, #tpu.memory_space<vmem>>, vector<2x16x128xf32>,
    return
  }
}

</mosaic_0001>

<llo_original>
// kernel: decoder5_forward.1
$region0: #{decoder5_forward.1}
  #allocation0 [shape = 'u32[]', space=smem, size = 0x4, offset = 0x4, fixed_abs, tag = 'smem constant byte address 0x4 - core index']
  #allocation1 [shape = 'u32[72,128]{1,0:T(1,128)}', space=vmem, size = 0x9000, scoped, tag = 'internal scratch']
  %s0 = inlined_call_operand.vmem [shape: f32[2,16,128], index: 0, kind: input, shape index: {}]
  %s1 = inlined_call_operand.vmem [shape: f32[2,16], index: 1, kind: input, shape index: {}]
  %s2 = inlined_call_operand.vmem [shape: bf16[2,16,16], index: 2, kind: input, shape index: {}]
  %s3 = inlined_call_operand.vmem [shape: f32[2,16,1], index: 3, kind: input, shape index: {}]
  %s4 = inlined_call_operand.vmem [shape: bf16[4,128,128], index: 4, kind: input, shape index: {}]
  %s5 = inlined_call_operand.vmem [shape: f32[16,1536], index: 5, kind: input, shape index: {}]
  %s6 = inlined_call_operand.vmem [shape: bf16[2,128,256], index: 6, kind: input, shape index: {}]
  %s7 = inlined_call_operand.vmem [shape: f32[2,3,128], index: 7, kind: input, shape index: {}]
  %s8 = inlined_call_operand.vmem [shape: f32[2,16,128], index: 8, kind: output, shape index: {}]
  %s9 = sld [smem:[#allocation0]]
  $region42: #{decoder5_forward.1} parent=0
    _
  %s11 = ssub.s32 1, %s9
  %s12 = scalar_select 0, %s11, %s9
  // Predicated region
  $region2: #{decoder5_forward.1} parent=0 // pred_check
    _
  $region3: #{decoder5_forward.1} parent=0 // pred_check_branch
    %14 = sbr.rel (0) target = $region5
  $region4: #{decoder5_forward.1} parent=0 // pred_region
    _
  $region5: #{decoder5_forward.1} parent=0 // pred_fallthru
    _
  // Predicated region
  $region6: #{decoder5_forward.1} parent=0 // pred_check
    _
  $region7: #{decoder5_forward.1} parent=0 // pred_check_branch
    %16 = sbr.rel (0) target = $region9
  $region8: #{decoder5_forward.1} parent=0 // pred_region
    _
  $region9: #{decoder5_forward.1} parent=0 // pred_fallthru
    _
  // Predicated region
  $region10: #{decoder5_forward.1} parent=0 // pred_check
    _
  $region11: #{decoder5_forward.1} parent=0 // pred_check_branch
    %18 = sbr.rel (0) target = $region13
  $region12: #{decoder5_forward.1} parent=0 // pred_region
    _
  $region13: #{decoder5_forward.1} parent=0 // pred_fallthru
    _
  // Predicated region
  $region14: #{decoder5_forward.1} parent=0 // pred_check
    _
  $region15: #{decoder5_forward.1} parent=0 // pred_check_branch
    %20 = sbr.rel (0) target = $region17
  $region16: #{decoder5_forward.1} parent=0 // pred_region
    _
  $region17: #{decoder5_forward.1} parent=0 // pred_fallthru
    _
  // Predicated region
  $region18: #{decoder5_forward.1} parent=0 // pred_check
    _
  $region19: #{decoder5_forward.1} parent=0 // pred_check_branch
    %22 = sbr.rel (0) target = $region21
  $region20: #{decoder5_forward.1} parent=0 // pred_region
    _
  $region21: #{decoder5_forward.1} parent=0 // pred_fallthru
    _
  // Predicated region
  $region22: #{decoder5_forward.1} parent=0 // pred_check
    _
  $region23: #{decoder5_forward.1} parent=0 // pred_check_branch
    %24 = sbr.rel (0) target = $region25
  $region24: #{decoder5_forward.1} parent=0 // pred_region
    _
  $region25: #{decoder5_forward.1} parent=0 // pred_fallthru
    _
  // Predicated region
  $region26: #{decoder5_forward.1} parent=0 // pred_check
    _
  $region27: #{decoder5_forward.1} parent=0 // pred_check_branch
    %26 = sbr.rel (0) target = $region29
  $region28: #{decoder5_forward.1} parent=0 // pred_region
    _
  $region29: #{decoder5_forward.1} parent=0 // pred_fallthru
    _
  // Predicated region
  $region30: #{decoder5_forward.1} parent=0 // pred_check
    _
  $region31: #{decoder5_forward.1} parent=0 // pred_check_branch
    %28 = sbr.rel (0) target = $region33
  $region32: #{decoder5_forward.1} parent=0 // pred_region
    _
  $region33: #{decoder5_forward.1} parent=0 // pred_fallthru
    _
  %v30 = vld [vmem:[%s1] sm:$0x3]
  %v31 = vld [vmem:[%s5] sm:$0xff]
  %v32 = vld [vmem:[%s5 + $0x8] sm:$0xff]
  %v33 = vld [vmem:[%s5 + $0x10] sm:$0xff]
  %v34 = vld [vmem:[%s5 + $0x18] sm:$0xff]
  %v35 = vld [vmem:[%s5 + $0x20] sm:$0xff]
  %v36 = vld [vmem:[%s5 + $0x28] sm:$0xff]
  %v37 = vld [vmem:[%s5 + $0x30] sm:$0xff]
  %v38 = vld [vmem:[%s5 + $0x38] sm:$0xff]
  %v39 = vld [vmem:[%s5 + $0x40] sm:$0xff]
  %v40 = vld [vmem:[%s5 + $0x48] sm:$0xff]
  %v41 = vld [vmem:[%s5 + $0x50] sm:$0xff]
  %v42 = vld [vmem:[%s5 + $0x58] sm:$0xff]
  %v43 = vld [vmem:[%s5 + $0x60] sm:$0xff]
  %v44 = vld [vmem:[%s5 + $0x68] sm:$0xff]
  %v45 = vld [vmem:[%s5 + $0x70] sm:$0xff]
  %v46 = vld [vmem:[%s5 + $0x78] sm:$0xff]
  %v47 = vld [vmem:[%s5 + $0x80] sm:$0xff]
  %v48 = vld [vmem:[%s5 + $0x88] sm:$0xff]
  %v49 = vld [vmem:[%s5 + $0x90] sm:$0xff]
  %v50 = vld [vmem:[%s5 + $0x98] sm:$0xff]
  %v51 = vld [vmem:[%s5 + $0xa0] sm:$0xff]
  %v52 = vld [vmem:[%s5 + $0xa8] sm:$0xff]
  %v53 = vld [vmem:[%s5 + $0xb0] sm:$0xff]
  %v54 = vld [vmem:[%s5 + $0xb8] sm:$0xff]
  %vm55 = vcmask 130048
  %v57 = vsel %vm55, %v30, 0
  %59 = vmatpush.msra.mxu0 0.0
  %60 = vmatpush.msra.mxu0 0.0
  %61 = vmatpush.msra.mxu0 0.0
  %62 = vmatpush.msra.mxu0 0.0
  %63 = vmatpush.msra.mxu0 0.0
  %64 = vmatpush.msra.mxu0 0.0
  %65 = vmatpush.msra.mxu0 0.0
  %66 = vmatpush.msra.mxu0 0.0
  %67 = vmatpush.msra.mxu0 0.0
  %68 = vmatpush.msra.mxu0 0.0
  %69 = vmatpush.msra.mxu0 0.0
  %70 = vmatpush.msra.mxu0 0.0
  %71 = vmatpush.msra.mxu0 0.0
  %72 = vmatpush.msra.mxu0 0.0
  %73 = vmatpush.msra.mxu0 %v43
  %74 = vmatpush.msra.mxu0 %v31
  %75 = vmatmul.f32.gmra.mxu0 %v57
  %v76 = vpop.f32.mrf.mxu0
  %v77 = vadd.f32 0.0, %v76
  %78 = vdwg.mxu0
  %79 = vmatpush.msra.mxu0 0.0
  %80 = vmatpush.msra.mxu0 0.0
  %81 = vmatpush.msra.mxu0 0.0
  %82 = vmatpush.msra.mxu0 0.0
  %83 = vmatpush.msra.mxu0 0.0
  %84 = vmatpush.msra.mxu0 0.0
  %85 = vmatpush.msra.mxu0 0.0
  %86 = vmatpush.msra.mxu0 0.0
  %87 = vmatpush.msra.mxu0 0.0
  %88 = vmatpush.msra.mxu0 0.0
  %89 = vmatpush.msra.mxu0 0.0
  %90 = vmatpush.msra.mxu0 0.0
  %91 = vmatpush.msra.mxu0 0.0
  %92 = vmatpush.msra.mxu0 0.0
  %93 = vmatpush.msra.mxu0 %v44
  %94 = vmatpush.msra.mxu0 %v32
  %95 = vmatmul.f32.gmra.mxu0 %v57
  %v96 = vpop.f32.mrf.mxu0
  %v97 = vadd.f32 0.0, %v96
  %98 = vdwg.mxu0
  %99 = vmatpush.msra.mxu0 0.0
  %100 = vmatpush.msra.mxu0 0.0
  %101 = vmatpush.msra.mxu0 0.0
  %102 = vmatpush.msra.mxu0 0.0
  %103 = vmatpush.msra.mxu0 0.0
  %104 = vmatpush.msra.mxu0 0.0
  %105 = vmatpush.msra.mxu0 0.0
  %106 = vmatpush.msra.mxu0 0.0
  %107 = vmatpush.msra.mxu0 0.0
  %108 = vmatpush.msra.mxu0 0.0
  %109 = vmatpush.msra.mxu0 0.0
  %110 = vmatpush.msra.mxu0 0.0
  %111 = vmatpush.msra.mxu0 0.0
  %112 = vmatpush.msra.mxu0 0.0
  %113 = vmatpush.msra.mxu0 %v45
  %114 = vmatpush.msra.mxu0 %v33
  %115 = vmatmul.f32.gmra.mxu0 %v57
  %v116 = vpop.f32.mrf.mxu0
  %v117 = vadd.f32 0.0, %v116
  %118 = vdwg.mxu0
  %119 = vmatpush.msra.mxu0 0.0
  %120 = vmatpush.msra.mxu0 0.0
  %121 = vmatpush.msra.mxu0 0.0
  %122 = vmatpush.msra.mxu0 0.0
  %123 = vmatpush.msra.mxu0 0.0
  %124 = vmatpush.msra.mxu0 0.0
  %125 = vmatpush.msra.mxu0 0.0
  %126 = vmatpush.msra.mxu0 0.0
  %127 = vmatpush.msra.mxu0 0.0
  %128 = vmatpush.msra.mxu0 0.0
  %129 = vmatpush.msra.mxu0 0.0
  %130 = vmatpush.msra.mxu0 0.0
  %131 = vmatpush.msra.mxu0 0.0
  %132 = vmatpush.msra.mxu0 0.0
  %133 = vmatpush.msra.mxu0 %v46
  %134 = vmatpush.msra.mxu0 %v34
  %135 = vmatmul.f32.gmra.mxu0 %v57
  %v136 = vpop.f32.mrf.mxu0
  %v137 = vadd.f32 0.0, %v136
  %138 = vdwg.mxu0
  %139 = vmatpush.msra.mxu0 0.0
  %140 = vmatpush.msra.mxu0 0.0
  %141 = vmatpush.msra.mxu0 0.0
  %142 = vmatpush.msra.mxu0 0.0
  %143 = vmatpush.msra.mxu0 0.0
  %144 = vmatpush.msra.mxu0 0.0
  %145 = vmatpush.msra.mxu0 0.0
  %146 = vmatpush.msra.mxu0 0.0
  %147 = vmatpush.msra.mxu0 0.0
  %148 = vmatpush.msra.mxu0 0.0
  %149 = vmatpush.msra.mxu0 0.0
  %150 = vmatpush.msra.mxu0 0.0
  %151 = vmatpush.msra.mxu0 0.0
  %152 = vmatpush.msra.mxu0 0.0
  %153 = vmatpush.msra.mxu0 %v47
  %154 = vmatpush.msra.mxu0 %v35
  %155 = vmatmul.f32.gmra.mxu0 %v57
  %v156 = vpop.f32.mrf.mxu0
  %v157 = vadd.f32 0.0, %v156
  %158 = vdwg.mxu0
  %159 = vmatpush.msra.mxu0 0.0
  %160 = vmatpush.msra.mxu0 0.0
  %161 = vmatpush.msra.mxu0 0.0
  %162 = vmatpush.msra.mxu0 0.0
  %163 = vmatpush.msra.mxu0 0.0
  %164 = vmatpush.msra.mxu0 0.0
  %165 = vmatpush.msra.mxu0 0.0
  %166 = vmatpush.msra.mxu0 0.0
  %167 = vmatpush.msra.mxu0 0.0
  %168 = vmatpush.msra.mxu0 0.0
  %169 = vmatpush.msra.mxu0 0.0
  %170 = vmatpush.msra.mxu0 0.0
  %171 = vmatpush.msra.mxu0 0.0
  %172 = vmatpush.msra.mxu0 0.0
  %173 = vmatpush.msra.mxu0 %v48
  %174 = vmatpush.msra.mxu0 %v36
  %175 = vmatmul.f32.gmra.mxu0 %v57
  %v176 = vpop.f32.mrf.mxu0
  %v177 = vadd.f32 0.0, %v176
  %178 = vdwg.mxu0
  %179 = vmatpush.msra.mxu0 0.0
  %180 = vmatpush.msra.mxu0 0.0
  %181 = vmatpush.msra.mxu0 0.0
  %182 = vmatpush.msra.mxu0 0.0
  %183 = vmatpush.msra.mxu0 0.0
  %184 = vmatpush.msra.mxu0 0.0
  %185 = vmatpush.msra.mxu0 0.0
  %186 = vmatpush.msra.mxu0 0.0
  %187 = vmatpush.msra.mxu0 0.0
  %188 = vmatpush.msra.mxu0 0.0
  %189 = vmatpush.msra.mxu0 0.0
  %190 = vmatpush.msra.mxu0 0.0
  %191 = vmatpush.msra.mxu0 0.0
  %192 = vmatpush.msra.mxu0 0.0
  %193 = vmatpush.msra.mxu0 %v49
  %194 = vmatpush.msra.mxu0 %v37
  %195 = vmatmul.f32.gmra.mxu0 %v57
  %v196 = vpop.f32.mrf.mxu0
  %v197 = vadd.f32 0.0, %v196
  %198 = vdwg.mxu0
  %199 = vmatpush.msra.mxu0 0.0
  %200 = vmatpush.msra.mxu0 0.0
  %201 = vmatpush.msra.mxu0 0.0
  %202 = vmatpush.msra.mxu0 0.0
  %203 = vmatpush.msra.mxu0 0.0
  %204 = vmatpush.msra.mxu0 0.0
  %205 = vmatpush.msra.mxu0 0.0
  %206 = vmatpush.msra.mxu0 0.0
  %207 = vmatpush.msra.mxu0 0.0
  %208 = vmatpush.msra.mxu0 0.0
  %209 = vmatpush.msra.mxu0 0.0
  %210 = vmatpush.msra.mxu0 0.0
  %211 = vmatpush.msra.mxu0 0.0
  %212 = vmatpush.msra.mxu0 0.0
  %213 = vmatpush.msra.mxu0 %v50
  %214 = vmatpush.msra.mxu0 %v38
  %215 = vmatmul.f32.gmra.mxu0 %v57
  %v216 = vpop.f32.mrf.mxu0
  %v217 = vadd.f32 0.0, %v216
  %218 = vdwg.mxu0
  %219 = vmatpush.msra.mxu0 0.0
  %220 = vmatpush.msra.mxu0 0.0
  %221 = vmatpush.msra.mxu0 0.0
  %222 = vmatpush.msra.mxu0 0.0
  %223 = vmatpush.msra.mxu0 0.0
  %224 = vmatpush.msra.mxu0 0.0
  %225 = vmatpush.msra.mxu0 0.0
  %226 = vmatpush.msra.mxu0 0.0
  %227 = vmatpush.msra.mxu0 0.0
  %228 = vmatpush.msra.mxu0 0.0
  %229 = vmatpush.msra.mxu0 0.0
  %230 = vmatpush.msra.mxu0 0.0
  %231 = vmatpush.msra.mxu0 0.0
  %232 = vmatpush.msra.mxu0 0.0
  %233 = vmatpush.msra.mxu0 %v51
  %234 = vmatpush.msra.mxu0 %v39
  %235 = vmatmul.f32.gmra.mxu0 %v57
  %v236 = vpop.f32.mrf.mxu0
  %v237 = vadd.f32 0.0, %v236
  %238 = vdwg.mxu0
  %239 = vmatpush.msra.mxu0 0.0
  %240 = vmatpush.msra.mxu0 0.0
  %241 = vmatpush.msra.mxu0 0.0
  %242 = vmatpush.msra.mxu0 0.0
  %243 = vmatpush.msra.mxu0 0.0
  %244 = vmatpush.msra.mxu0 0.0
  %245 = vmatpush.msra.mxu0 0.0
  %246 = vmatpush.msra.mxu0 0.0
  %247 = vmatpush.msra.mxu0 0.0
  %248 = vmatpush.msra.mxu0 0.0
  %249 = vmatpush.msra.mxu0 0.0
  %250 = vmatpush.msra.mxu0 0.0
  %251 = vmatpush.msra.mxu0 0.0
  %252 = vmatpush.msra.mxu0 0.0
  %253 = vmatpush.msra.mxu0 %v52
  %254 = vmatpush.msra.mxu0 %v40
  %255 = vmatmul.f32.gmra.mxu0 %v57
  %v256 = vpop.f32.mrf.mxu0
  %v257 = vadd.f32 0.0, %v256
  %258 = vdwg.mxu0
  %259 = vmatpush.msra.mxu0 0.0
  %260 = vmatpush.msra.mxu0 0.0
  %261 = vmatpush.msra.mxu0 0.0
  %262 = vmatpush.msra.mxu0 0.0
  %263 = vmatpush.msra.mxu0 0.0
  %264 = vmatpush.msra.mxu0 0.0
  %265 = vmatpush.msra.mxu0 0.0
  %266 = vmatpush.msra.mxu0 0.0
  %267 = vmatpush.msra.mxu0 0.0
  %268 = vmatpush.msra.mxu0 0.0
  %269 = vmatpush.msra.mxu0 0.0
  %270 = vmatpush.msra.mxu0 0.0
  %271 = vmatpush.msra.mxu0 0.0
  %272 = vmatpush.msra.mxu0 0.0
  %273 = vmatpush.msra.mxu0 %v53
  %274 = vmatpush.msra.mxu0 %v41
  %275 = vmatmul.f32.gmra.mxu0 %v57
  %v276 = vpop.f32.mrf.mxu0
  %v277 = vadd.f32 0.0, %v276
  %278 = vdwg.mxu0
  %279 = vmatpush.msra.mxu0 0.0
  %280 = vmatpush.msra.mxu0 0.0
  %281 = vmatpush.msra.mxu0 0.0
  %282 = vmatpush.msra.mxu0 0.0
  %283 = vmatpush.msra.mxu0 0.0
  %284 = vmatpush.msra.mxu0 0.0
  %285 = vmatpush.msra.mxu0 0.0
  %286 = vmatpush.msra.mxu0 0.0
  %287 = vmatpush.msra.mxu0 0.0
  %288 = vmatpush.msra.mxu0 0.0
  %289 = vmatpush.msra.mxu0 0.0
  %290 = vmatpush.msra.mxu0 0.0
  %291 = vmatpush.msra.mxu0 0.0
  %292 = vmatpush.msra.mxu0 0.0
  %293 = vmatpush.msra.mxu0 %v54
  %294 = vmatpush.msra.mxu0 %v42
  %295 = vmatmul.f32.gmra.mxu0 %v57
  %v296 = vpop.f32.mrf.mxu0
  %v297 = vadd.f32 0.0, %v296
  %298 = vdwg.mxu0
  %v299 = vld [vmem:[%s0] sm:$0xff]
  %v300 = vld [vmem:[%s0 + $0x8] sm:$0xff]
  %v301 = vld [vmem:[%s0 + $0x10] sm:$0xff]
  %v302 = vld [vmem:[%s0 + $0x18] sm:$0xff]
  %v303 = vpack.c.bf16 %v300, %v299
  %v304 = vpack.c.bf16 %v302, %v301
  %v305 = vld [vmem:[%s4] sm:$0xf]
  %v306 = vld [vmem:[%s4 + $0x4] sm:$0xf]
  %v307 = vld [vmem:[%s4 + $0x8] sm:$0xf]
  %v308 = vld [vmem:[%s4 + $0xc] sm:$0xf]
  %v309 = vld [vmem:[%s4 + $0x10] sm:$0xf]
  %v310 = vld [vmem:[%s4 + $0x14] sm:$0xf]
  %v311 = vld [vmem:[%s4 + $0x18] sm:$0xf]
  %v312 = vld [vmem:[%s4 + $0x1c] sm:$0xf]
  %v313 = vld [vmem:[%s4 + $0x20] sm:$0xf]
  %v314 = vld [vmem:[%s4 + $0x24] sm:$0xf]
  %v315 = vld [vmem:[%s4 + $0x28] sm:$0xf]
  %v316 = vld [vmem:[%s4 + $0x2c] sm:$0xf]
  %v317 = vld [vmem:[%s4 + $0x30] sm:$0xf]
  %v318 = vld [vmem:[%s4 + $0x34] sm:$0xf]
  %v319 = vld [vmem:[%s4 + $0x38] sm:$0xf]
  %v320 = vld [vmem:[%s4 + $0x3c] sm:$0xf]
  %v337 = vunpack.c.l.b16 %v305
  %v338 = vunpack.c.l.b16 %v306
  %v339 = vunpack.c.l.b16 %v307
  %v340 = vunpack.c.l.b16 %v308
  %v341 = vunpack.c.l.b16 %v309
  %v342 = vunpack.c.l.b16 %v310
  %v343 = vunpack.c.l.b16 %v311
  %v344 = vunpack.c.l.b16 %v312
  %v345 = vunpack.c.l.b16 %v313
  %v346 = vunpack.c.l.b16 %v314
  %v347 = vunpack.c.l.b16 %v315
  %v348 = vunpack.c.l.b16 %v316
  %v349 = vunpack.c.l.b16 %v317
  %v350 = vunpack.c.l.b16 %v318
  %v351 = vunpack.c.l.b16 %v319
  %v352 = vunpack.c.l.b16 %v320
  %v353 = vpack.c.b16 %v338, %v337
  %v354 = vpack.c.b16 %v340, %v339
  %v355 = vpack.c.b16 %v342, %v341
  %v356 = vpack.c.b16 %v344, %v343
  %v357 = vpack.c.b16 %v346, %v345
  %v358 = vpack.c.b16 %v348, %v347
  %v359 = vpack.c.b16 %v350, %v349
  %v360 = vpack.c.b16 %v352, %v351
  %369 = vmatpush.bf16.msra.mxu0 %v360
  %370 = vmatpush.bf16.msra.mxu0 %v359
  %371 = vmatpush.bf16.msra.mxu0 %v358
  %372 = vmatpush.bf16.msra.mxu0 %v357
  %373 = vmatpush.bf16.msra.mxu0 %v356
  %374 = vmatpush.bf16.msra.mxu0 %v355
  %375 = vmatpush.bf16.msra.mxu0 %v354
  %376 = vmatpush.bf16.msra.mxu0 %v353
  %377 = vmatmul.bf16.gmra.mxu0 %v303
  %v378 = vpop.f32.mrf.mxu0
  %v379 = vadd.f32 0.0, %v378
  %v380 = vpop.f32.mrf.mxu0
  %v381 = vadd.f32 0.0, %v380
  %382 = vmatmul.bf16.gmra.mxu0 %v304
  %v383 = vpop.f32.mrf.mxu0
  %v384 = vadd.f32 0.0, %v383
  %v385 = vpop.f32.mrf.mxu0
  %v386 = vadd.f32 0.0, %v385
  %387 = vdwg.mxu0
  %v389 = vrot.slane %v77, 1
  %v390 = vperm.slane %v77, 0
  %v391 = vperm.slane %v389, 0
  %v394 = vadd.f32 %v379, %v390
  %v395 = vadd.f32 %v381, %v390
  %v396 = vadd.f32 %v384, %v391
  %v397 = vadd.f32 %v386, %v391
  %v398 = vadd.f32 %v394, %v395
  %v399 = vrot.slane %v398, 4
  %v400 = vadd.f32 %v398, %v399
  %v401 = vrot.slane %v400, 2
  %v402 = vadd.f32 %v400, %v401
  %v403 = vrot.slane %v402, 1
  %v404 = vadd.f32 %v402, %v403
  %v405 = vadd.f32 %v396, %v397
  %v406 = vrot.slane %v405, 4
  %v407 = vadd.f32 %v405, %v406
  %v408 = vrot.slane %v407, 2
  %v409 = vadd.f32 %v407, %v408
  %v410 = vrot.slane %v409, 1
  %v411 = vadd.f32 %v409, %v410
  %v412 = vrcp.pop 16.0
  %v413 = vmul.f32 16.0, %v412
  %v414 = vsub.f32 1.0, %v413
  %v415 = vmul.f32 %v412, %v414
  %v416 = vadd.f32 %v412, %v415
  %vm417 = vweird.f32 %v412
  %v418 = vsel %vm417, %v412, %v416
  %v419 = vmul.f32 %v404, %v418
  %v420 = vmul.f32 %v411, %v418
  %v421 = vmul.f32 %v394, %v394
  %v422 = vmul.f32 %v395, %v395
  %v423 = vmul.f32 %v396, %v396
  %v424 = vmul.f32 %v397, %v397
  %v425 = vadd.f32 %v421, %v422
  %v426 = vrot.slane %v425, 4
  %v427 = vadd.f32 %v425, %v426
  %v428 = vrot.slane %v427, 2
  %v429 = vadd.f32 %v427, %v428
  %v430 = vrot.slane %v429, 1
  %v431 = vadd.f32 %v429, %v430
  %v432 = vadd.f32 %v423, %v424
  %v433 = vrot.slane %v432, 4
  %v434 = vadd.f32 %v432, %v433
  %v435 = vrot.slane %v434, 2
  %v436 = vadd.f32 %v434, %v435
  %v437 = vrot.slane %v436, 1
  %v438 = vadd.f32 %v436, %v437
  %v439 = vmul.f32 %v431, %v418
  %v440 = vmul.f32 %v438, %v418
  %v441 = vmul.f32 %v419, %v419
  %v442 = vmul.f32 %v420, %v420
  %v443 = vsub.f32 %v439, %v441
  %v444 = vsub.f32 %v440, %v442
  %v445 = vmax.f32 %v443, 0.0
  %v446 = vmax.f32 %v444, 0.0
  %v447 = vsub.f32 %v394, %v419
  %v448 = vsub.f32 %v395, %v419
  %v449 = vsub.f32 %v396, %v420
  %v450 = vsub.f32 %v397, %v420
  %v451 = vadd.f32 %v445, 1e-05
  %v452 = vadd.f32 %v446, 1e-05
  %v453 = vrsqrt.pop %v451
  %v454 = vmul.f32 %v453, %v451
  %v455 = vmul.f32 %v454, %v453
  %v456 = vmul.f32 0.5, %v455
  %v457 = vsub.f32 1.5, %v456
  %v458 = vmul.f32 %v453, %v457
  %vm459 = vweird.f32 %v451
  %vm460 = vweird.f32 %v453
  %vm461 = vmor %vm459, %vm460
  %v462 = vsel %vm461, %v453, %v458
  %v463 = vrsqrt.pop %v452
  %v464 = vmul.f32 %v463, %v452
  %v465 = vmul.f32 %v464, %v463
  %v466 = vmul.f32 0.5, %v465
  %v467 = vsub.f32 1.5, %v466
  %v468 = vmul.f32 %v463, %v467
  %vm469 = vweird.f32 %v452
  %vm470 = vweird.f32 %v463
  %vm471 = vmor %vm469, %vm470
  %v472 = vsel %vm471, %v463, %v468
  %v473 = vmul.f32 %v447, %v462
  %v474 = vmul.f32 %v448, %v462
  %v475 = vmul.f32 %v449, %v472
  %v476 = vmul.f32 %v450, %v472
  %v478 = vrot.slane %v157, 1
  %v481 = vrot.slane %v177, 1
  %v482 = vadd.f32 %v157, 1.0
  %v483 = vadd.f32 %v478, 1.0
  %v486 = vperm.slane %v482, 0
  %v487 = vperm.slane %v483, 0
  %v490 = vmul.f32 %v473, %v486
  %v491 = vmul.f32 %v474, %v486
  %v492 = vmul.f32 %v475, %v487
  %v493 = vmul.f32 %v476, %v487
  %v494 = vperm.slane %v177, 0
  %v495 = vperm.slane %v481, 0
  %v498 = vadd.f32 %v490, %v494
  %v499 = vadd.f32 %v491, %v494
  %v500 = vadd.f32 %v492, %v495
  %v501 = vadd.f32 %v493, %v495
  %vm502 = vcmp.ge.f32.partialorder %v498, 0.0
  %vm503 = vcmp.ge.f32.partialorder %v499, 0.0
  %vm504 = vcmp.ge.f32.partialorder %v500, 0.0
  %vm505 = vcmp.ge.f32.partialorder %v501, 0.0
  %v506 = vmul.f32 %v498, 0.2
  %v507 = vmul.f32 %v499, 0.2
  %v508 = vmul.f32 %v500, 0.2
  %v509 = vmul.f32 %v501, 0.2
  %v510 = vsel %vm502, %v498, %v506
  %v511 = vsel %vm503, %v499, %v507
  %v512 = vsel %vm504, %v500, %v508
  %v513 = vsel %vm505, %v501, %v509
  %v514 = vpack.c.bf16 %v511, %v510
  %v515 = vpack.c.bf16 %v513, %v512
  %s516 = scalar_lea.vmem %s4, 64
  %v517 = vld [vmem:[%s516] sm:$0xf]
  %v518 = vld [vmem:[%s516 + $0x4] sm:$0xf]
  %v519 = vld [vmem:[%s516 + $0x8] sm:$0xf]
  %v520 = vld [vmem:[%s516 + $0xc] sm:$0xf]
  %v521 = vld [vmem:[%s516 + $0x10] sm:$0xf]
  %v522 = vld [vmem:[%s516 + $0x14] sm:$0xf]
  %v523 = vld [vmem:[%s516 + $0x18] sm:$0xf]
  %v524 = vld [vmem:[%s516 + $0x1c] sm:$0xf]
  %v525 = vld [vmem:[%s516 + $0x20] sm:$0xf]
  %v526 = vld [vmem:[%s516 + $0x24] sm:$0xf]
  %v527 = vld [vmem:[%s516 + $0x28] sm:$0xf]
  %v528 = vld [vmem:[%s516 + $0x2c] sm:$0xf]
  %v529 = vld [vmem:[%s516 + $0x30] sm:$0xf]
  %v530 = vld [vmem:[%s516 + $0x34] sm:$0xf]
  %v531 = vld [vmem:[%s516 + $0x38] sm:$0xf]
  %v532 = vld [vmem:[%s516 + $0x3c] sm:$0xf]
  %v549 = vunpack.c.l.b16 %v517
  %v550 = vunpack.c.l.b16 %v518
  %v551 = vunpack.c.l.b16 %v519
  %v552 = vunpack.c.l.b16 %v520
  %v553 = vunpack.c.l.b16 %v521
  %v554 = vunpack.c.l.b16 %v522
  %v555 = vunpack.c.l.b16 %v523
  %v556 = vunpack.c.l.b16 %v524
  %v557 = vunpack.c.l.b16 %v525
  %v558 = vunpack.c.l.b16 %v526
  %v559 = vunpack.c.l.b16 %v527
  %v560 = vunpack.c.l.b16 %v528
  %v561 = vunpack.c.l.b16 %v529
  %v562 = vunpack.c.l.b16 %v530
  %v563 = vunpack.c.l.b16 %v531
  %v564 = vunpack.c.l.b16 %v532
  %v565 = vpack.c.b16 %v550, %v549
  %v566 = vpack.c.b16 %v552, %v551
  %v567 = vpack.c.b16 %v554, %v553
  %v568 = vpack.c.b16 %v556, %v555
  %v569 = vpack.c.b16 %v558, %v557
  %v570 = vpack.c.b16 %v560, %v559
  %v571 = vpack.c.b16 %v562, %v561
  %v572 = vpack.c.b16 %v564, %v563
  %581 = vmatpush.bf16.msra.mxu0 %v572
  %582 = vmatpush.bf16.msra.mxu0 %v571
  %583 = vmatpush.bf16.msra.mxu0 %v570
  %584 = vmatpush.bf16.msra.mxu0 %v569
  %585 = vmatpush.bf16.msra.mxu0 %v568
  %586 = vmatpush.bf16.msra.mxu0 %v567
  %587 = vmatpush.bf16.msra.mxu0 %v566
  %588 = vmatpush.bf16.msra.mxu0 %v565
  %589 = vmatmul.bf16.gmra.mxu0 %v514
  %v590 = vpop.f32.mrf.mxu0
  %v591 = vadd.f32 0.0, %v590
  %v592 = vpop.f32.mrf.mxu0
  %v593 = vadd.f32 0.0, %v592
  %594 = vmatmul.bf16.gmra.mxu0 %v515
  %v595 = vpop.f32.mrf.mxu0
  %v596 = vadd.f32 0.0, %v595
  %v597 = vpop.f32.mrf.mxu0
  %v598 = vadd.f32 0.0, %v597
  %599 = vdwg.mxu0
  %v601 = vrot.slane %v97, 1
  %v602 = vperm.slane %v97, 0
  %v603 = vperm.slane %v601, 0
  %v606 = vadd.f32 %v591, %v602
  %v607 = vadd.f32 %v593, %v602
  %v608 = vadd.f32 %v596, %v603
  %v609 = vadd.f32 %v598, %v603
  %v610 = vadd.f32 %v606, %v607
  %v611 = vrot.slane %v610, 4
  %v612 = vadd.f32 %v610, %v611
  %v613 = vrot.slane %v612, 2
  %v614 = vadd.f32 %v612, %v613
  %v615 = vrot.slane %v614, 1
  %v616 = vadd.f32 %v614, %v615
  %v617 = vadd.f32 %v608, %v609
  %v618 = vrot.slane %v617, 4
  %v619 = vadd.f32 %v617, %v618
  %v620 = vrot.slane %v619, 2
  %v621 = vadd.f32 %v619, %v620
  %v622 = vrot.slane %v621, 1
  %v623 = vadd.f32 %v621, %v622
  %v624 = vmul.f32 %v616, %v418
  %v625 = vmul.f32 %v623, %v418
  %v626 = vmul.f32 %v606, %v606
  %v627 = vmul.f32 %v607, %v607
  %v628 = vmul.f32 %v608, %v608
  %v629 = vmul.f32 %v609, %v609
  %v630 = vadd.f32 %v626, %v627
  %v631 = vrot.slane %v630, 4
  %v632 = vadd.f32 %v630, %v631
  %v633 = vrot.slane %v632, 2
  %v634 = vadd.f32 %v632, %v633
  %v635 = vrot.slane %v634, 1
  %v636 = vadd.f32 %v634, %v635
  %v637 = vadd.f32 %v628, %v629
  %v638 = vrot.slane %v637, 4
  %v639 = vadd.f32 %v637, %v638
  %v640 = vrot.slane %v639, 2
  %v641 = vadd.f32 %v639, %v640
  %v642 = vrot.slane %v641, 1
  %v643 = vadd.f32 %v641, %v642
  %v644 = vmul.f32 %v636, %v418
  %v645 = vmul.f32 %v643, %v418
  %v646 = vmul.f32 %v624, %v624
  %v647 = vmul.f32 %v625, %v625
  %v648 = vsub.f32 %v644, %v646
  %v649 = vsub.f32 %v645, %v647
  %v650 = vmax.f32 %v648, 0.0
  %v651 = vmax.f32 %v649, 0.0
  %v652 = vsub.f32 %v606, %v624
  %v653 = vsub.f32 %v607, %v624
  %v654 = vsub.f32 %v608, %v625
  %v655 = vsub.f32 %v609, %v625
  %v656 = vadd.f32 %v650, 1e-05
  %v657 = vadd.f32 %v651, 1e-05
  %v658 = vrsqrt.pop %v656
  %v659 = vmul.f32 %v658, %v656
  %v660 = vmul.f32 %v659, %v658
  %v661 = vmul.f32 0.5, %v660
  %v662 = vsub.f32 1.5, %v661
  %v663 = vmul.f32 %v658, %v662
  %vm664 = vweird.f32 %v656
  %vm665 = vweird.f32 %v658
  %vm666 = vmor %vm664, %vm665
  %v667 = vsel %vm666, %v658, %v663
  %v668 = vrsqrt.pop %v657
  %v669 = vmul.f32 %v668, %v657
  %v670 = vmul.f32 %v669, %v668
  %v671 = vmul.f32 0.5, %v670
  %v672 = vsub.f32 1.5, %v671
  %v673 = vmul.f32 %v668, %v672
  %vm674 = vweird.f32 %v657
  %vm675 = vweird.f32 %v668
  %vm676 = vmor %vm674, %vm675
  %v677 = vsel %vm676, %v668, %v673
  %v678 = vmul.f32 %v652, %v667
  %v679 = vmul.f32 %v653, %v667
  %v680 = vmul.f32 %v654, %v677
  %v681 = vmul.f32 %v655, %v677
  %v683 = vrot.slane %v197, 1
  %v686 = vrot.slane %v217, 1
  %v687 = vadd.f32 %v197, 1.0
  %v688 = vadd.f32 %v683, 1.0
  %v691 = vperm.slane %v687, 0
  %v692 = vperm.slane %v688, 0
  %v695 = vmul.f32 %v678, %v691
  %v696 = vmul.f32 %v679, %v691
  %v697 = vmul.f32 %v680, %v692
  %v698 = vmul.f32 %v681, %v692
  %v699 = vperm.slane %v217, 0
  %v700 = vperm.slane %v686, 0
  %v703 = vadd.f32 %v695, %v699
  %v704 = vadd.f32 %v696, %v699
  %v705 = vadd.f32 %v697, %v700
  %v706 = vadd.f32 %v698, %v700
  %vm707 = vcmp.ge.f32.partialorder %v703, 0.0
  %vm708 = vcmp.ge.f32.partialorder %v704, 0.0
  %vm709 = vcmp.ge.f32.partialorder %v705, 0.0
  %vm710 = vcmp.ge.f32.partialorder %v706, 0.0
  %v711 = vmul.f32 %v703, 0.2
  %v712 = vmul.f32 %v704, 0.2
  %v713 = vmul.f32 %v705, 0.2
  %v714 = vmul.f32 %v706, 0.2
  %v715 = vsel %vm707, %v703, %v711
  %v716 = vsel %vm708, %v704, %v712
  %v717 = vsel %vm709, %v705, %v713
  %v718 = vsel %vm710, %v706, %v714
  %v719 = vpack.c.bf16 %v716, %v715
  %v720 = vpack.c.bf16 %v718, %v717
  %s721 = scalar_lea.vmem %s4, 128
  %v722 = vld [vmem:[%s721] sm:$0xf]
  %v723 = vld [vmem:[%s721 + $0x4] sm:$0xf]
  %v724 = vld [vmem:[%s721 + $0x8] sm:$0xf]
  %v725 = vld [vmem:[%s721 + $0xc] sm:$0xf]
  %v726 = vld [vmem:[%s721 + $0x10] sm:$0xf]
  %v727 = vld [vmem:[%s721 + $0x14] sm:$0xf]
  %v728 = vld [vmem:[%s721 + $0x18] sm:$0xf]
  %v729 = vld [vmem:[%s721 + $0x1c] sm:$0xf]
  %v730 = vld [vmem:[%s721 + $0x20] sm:$0xf]
  %v731 = vld [vmem:[%s721 + $0x24] sm:$0xf]
  %v732 = vld [vmem:[%s721 + $0x28] sm:$0xf]
  %v733 = vld [vmem:[%s721 + $0x2c] sm:$0xf]
  %v734 = vld [vmem:[%s721 + $0x30] sm:$0xf]
  %v735 = vld [vmem:[%s721 + $0x34] sm:$0xf]
  %v736 = vld [vmem:[%s721 + $0x38] sm:$0xf]
  %v737 = vld [vmem:[%s721 + $0x3c] sm:$0xf]
  %v754 = vunpack.c.l.b16 %v722
  %v755 = vunpack.c.l.b16 %v723
  %v756 = vunpack.c.l.b16 %v724
  %v757 = vunpack.c.l.b16 %v725
  %v758 = vunpack.c.l.b16 %v726
  %v759 = vunpack.c.l.b16 %v727
  %v760 = vunpack.c.l.b16 %v728
  %v761 = vunpack.c.l.b16 %v729
  %v762 = vunpack.c.l.b16 %v730
  %v763 = vunpack.c.l.b16 %v731
  %v764 = vunpack.c.l.b16 %v732
  %v765 = vunpack.c.l.b16 %v733
  %v766 = vunpack.c.l.b16 %v734
  %v767 = vunpack.c.l.b16 %v735
  %v768 = vunpack.c.l.b16 %v736
  %v769 = vunpack.c.l.b16 %v737
  %v770 = vpack.c.b16 %v755, %v754
  %v771 = vpack.c.b16 %v757, %v756
  %v772 = vpack.c.b16 %v759, %v758
  %v773 = vpack.c.b16 %v761, %v760
  %v774 = vpack.c.b16 %v763, %v762
  %v775 = vpack.c.b16 %v765, %v764
  %v776 = vpack.c.b16 %v767, %v766
  %v777 = vpack.c.b16 %v769, %v768
  %786 = vmatpush.bf16.msra.mxu0 %v777
  %787 = vmatpush.bf16.msra.mxu0 %v776
  %788 = vmatpush.bf16.msra.mxu0 %v775
  %789 = vmatpush.bf16.msra.mxu0 %v774
  %790 = vmatpush.bf16.msra.mxu0 %v773
  %791 = vmatpush.bf16.msra.mxu0 %v772
  %792 = vmatpush.bf16.msra.mxu0 %v771
  %793 = vmatpush.bf16.msra.mxu0 %v770
  %794 = vmatmul.bf16.gmra.mxu0 %v719
  %v795 = vpop.f32.mrf.mxu0
  %v796 = vadd.f32 0.0, %v795
  %v797 = vpop.f32.mrf.mxu0
  %v798 = vadd.f32 0.0, %v797
  %799 = vmatmul.bf16.gmra.mxu0 %v720
  %v800 = vpop.f32.mrf.mxu0
  %v801 = vadd.f32 0.0, %v800
  %v802 = vpop.f32.mrf.mxu0
  %v803 = vadd.f32 0.0, %v802
  %804 = vdwg.mxu0
  %v806 = vrot.slane %v117, 1
  %v807 = vperm.slane %v117, 0
  %v808 = vperm.slane %v806, 0
  %v811 = vadd.f32 %v796, %v807
  %v812 = vadd.f32 %v798, %v807
  %v813 = vadd.f32 %v801, %v808
  %v814 = vadd.f32 %v803, %v808
  %v815 = vadd.f32 %v811, %v812
  %v816 = vrot.slane %v815, 4
  %v817 = vadd.f32 %v815, %v816
  %v818 = vrot.slane %v817, 2
  %v819 = vadd.f32 %v817, %v818
  %v820 = vrot.slane %v819, 1
  %v821 = vadd.f32 %v819, %v820
  %v822 = vadd.f32 %v813, %v814
  %v823 = vrot.slane %v822, 4
  %v824 = vadd.f32 %v822, %v823
  %v825 = vrot.slane %v824, 2
  %v826 = vadd.f32 %v824, %v825
  %v827 = vrot.slane %v826, 1
  %v828 = vadd.f32 %v826, %v827
  %v829 = vmul.f32 %v821, %v418
  %v830 = vmul.f32 %v828, %v418
  %v831 = vmul.f32 %v811, %v811
  %v832 = vmul.f32 %v812, %v812
  %v833 = vmul.f32 %v813, %v813
  %v834 = vmul.f32 %v814, %v814
  %v835 = vadd.f32 %v831, %v832
  %v836 = vrot.slane %v835, 4
  %v837 = vadd.f32 %v835, %v836
  %v838 = vrot.slane %v837, 2
  %v839 = vadd.f32 %v837, %v838
  %v840 = vrot.slane %v839, 1
  %v841 = vadd.f32 %v839, %v840
  %v842 = vadd.f32 %v833, %v834
  %v843 = vrot.slane %v842, 4
  %v844 = vadd.f32 %v842, %v843
  %v845 = vrot.slane %v844, 2
  %v846 = vadd.f32 %v844, %v845
  %v847 = vrot.slane %v846, 1
  %v848 = vadd.f32 %v846, %v847
  %v849 = vmul.f32 %v841, %v418
  %v850 = vmul.f32 %v848, %v418
  %v851 = vmul.f32 %v829, %v829
  %v852 = vmul.f32 %v830, %v830
  %v853 = vsub.f32 %v849, %v851
  %v854 = vsub.f32 %v850, %v852
  %v855 = vmax.f32 %v853, 0.0
  %v856 = vmax.f32 %v854, 0.0
  %v857 = vsub.f32 %v811, %v829
  %v858 = vsub.f32 %v812, %v829
  %v859 = vsub.f32 %v813, %v830
  %v860 = vsub.f32 %v814, %v830
  %v861 = vadd.f32 %v855, 1e-05
  %v862 = vadd.f32 %v856, 1e-05
  %v863 = vrsqrt.pop %v861
  %v864 = vmul.f32 %v863, %v861
  %v865 = vmul.f32 %v864, %v863
  %v866 = vmul.f32 0.5, %v865
  %v867 = vsub.f32 1.5, %v866
  %v868 = vmul.f32 %v863, %v867
  %vm869 = vweird.f32 %v861
  %vm870 = vweird.f32 %v863
  %vm871 = vmor %vm869, %vm870
  %v872 = vsel %vm871, %v863, %v868
  %v873 = vrsqrt.pop %v862
  %v874 = vmul.f32 %v873, %v862
  %v875 = vmul.f32 %v874, %v873
  %v876 = vmul.f32 0.5, %v875
  %v877 = vsub.f32 1.5, %v876
  %v878 = vmul.f32 %v873, %v877
  %vm879 = vweird.f32 %v862
  %vm880 = vweird.f32 %v873
  %vm881 = vmor %vm879, %vm880
  %v882 = vsel %vm881, %v873, %v878
  %v883 = vmul.f32 %v857, %v872
  %v884 = vmul.f32 %v858, %v872
  %v885 = vmul.f32 %v859, %v882
  %v886 = vmul.f32 %v860, %v882
  %v888 = vrot.slane %v237, 1
  %v891 = vrot.slane %v257, 1
  %v892 = vadd.f32 %v237, 1.0
  %v893 = vadd.f32 %v888, 1.0
  %v896 = vperm.slane %v892, 0
  %v897 = vperm.slane %v893, 0
  %v900 = vmul.f32 %v883, %v896
  %v901 = vmul.f32 %v884, %v896
  %v902 = vmul.f32 %v885, %v897
  %v903 = vmul.f32 %v886, %v897
  %v904 = vperm.slane %v257, 0
  %v905 = vperm.slane %v891, 0
  %v908 = vadd.f32 %v900, %v904
  %v909 = vadd.f32 %v901, %v904
  %v910 = vadd.f32 %v902, %v905
  %v911 = vadd.f32 %v903, %v905
  %vm912 = vcmp.ge.f32.partialorder %v908, 0.0
  %vm913 = vcmp.ge.f32.partialorder %v909, 0.0
  %vm914 = vcmp.ge.f32.partialorder %v910, 0.0
  %vm915 = vcmp.ge.f32.partialorder %v911, 0.0
  %v916 = vmul.f32 %v908, 0.2
  %v917 = vmul.f32 %v909, 0.2
  %v918 = vmul.f32 %v910, 0.2
  %v919 = vmul.f32 %v911, 0.2
  %v920 = vsel %vm912, %v908, %v916
  %v921 = vsel %vm913, %v909, %v917
  %v922 = vsel %vm914, %v910, %v918
  %v923 = vsel %vm915, %v911, %v919
  %v924 = vpack.c.bf16 %v921, %v920
  %v925 = vpack.c.bf16 %v923, %v922
  %s926 = scalar_lea.vmem %s4, 192
  %v927 = vld [vmem:[%s926] sm:$0xf]
  %v928 = vld [vmem:[%s926 + $0x4] sm:$0xf]
  %v929 = vld [vmem:[%s926 + $0x8] sm:$0xf]
  %v930 = vld [vmem:[%s926 + $0xc] sm:$0xf]
  %v931 = vld [vmem:[%s926 + $0x10] sm:$0xf]
  %v932 = vld [vmem:[%s926 + $0x14] sm:$0xf]
  %v933 = vld [vmem:[%s926 + $0x18] sm:$0xf]
  %v934 = vld [vmem:[%s926 + $0x1c] sm:$0xf]
  %v935 = vld [vmem:[%s926 + $0x20] sm:$0xf]
  %v936 = vld [vmem:[%s926 + $0x24] sm:$0xf]
  %v937 = vld [vmem:[%s926 + $0x28] sm:$0xf]
  %v938 = vld [vmem:[%s926 + $0x2c] sm:$0xf]
  %v939 = vld [vmem:[%s926 + $0x30] sm:$0xf]
  %v940 = vld [vmem:[%s926 + $0x34] sm:$0xf]
  %v941 = vld [vmem:[%s926 + $0x38] sm:$0xf]
  %v942 = vld [vmem:[%s926 + $0x3c] sm:$0xf]
  %v959 = vunpack.c.l.b16 %v927
  %v960 = vunpack.c.l.b16 %v928
  %v961 = vunpack.c.l.b16 %v929
  %v962 = vunpack.c.l.b16 %v930
  %v963 = vunpack.c.l.b16 %v931
  %v964 = vunpack.c.l.b16 %v932
  %v965 = vunpack.c.l.b16 %v933
  %v966 = vunpack.c.l.b16 %v934
  %v967 = vunpack.c.l.b16 %v935
  %v968 = vunpack.c.l.b16 %v936
  %v969 = vunpack.c.l.b16 %v937
  %v970 = vunpack.c.l.b16 %v938
  %v971 = vunpack.c.l.b16 %v939
  %v972 = vunpack.c.l.b16 %v940
  %v973 = vunpack.c.l.b16 %v941
  %v974 = vunpack.c.l.b16 %v942
  %v975 = vpack.c.b16 %v960, %v959
  %v976 = vpack.c.b16 %v962, %v961
  %v977 = vpack.c.b16 %v964, %v963
  %v978 = vpack.c.b16 %v966, %v965
  %v979 = vpack.c.b16 %v968, %v967
  %v980 = vpack.c.b16 %v970, %v969
  %v981 = vpack.c.b16 %v972, %v971
  %v982 = vpack.c.b16 %v974, %v973
  %991 = vmatpush.bf16.msra.mxu0 %v982
  %992 = vmatpush.bf16.msra.mxu0 %v981
  %993 = vmatpush.bf16.msra.mxu0 %v980
  %994 = vmatpush.bf16.msra.mxu0 %v979
  %995 = vmatpush.bf16.msra.mxu0 %v978
  %996 = vmatpush.bf16.msra.mxu0 %v977
  %997 = vmatpush.bf16.msra.mxu0 %v976
  %998 = vmatpush.bf16.msra.mxu0 %v975
  %999 = vmatmul.bf16.gmra.mxu0 %v924
  %v1000 = vpop.f32.mrf.mxu0
  %v1001 = vadd.f32 0.0, %v1000
  %v1002 = vpop.f32.mrf.mxu0
  %v1003 = vadd.f32 0.0, %v1002
  %1004 = vmatmul.bf16.gmra.mxu0 %v925
  %v1005 = vpop.f32.mrf.mxu0
  %v1006 = vadd.f32 0.0, %v1005
  %v1007 = vpop.f32.mrf.mxu0
  %v1008 = vadd.f32 0.0, %v1007
  %1009 = vdwg.mxu0
  %v1011 = vrot.slane %v137, 1
  %v1012 = vperm.slane %v137, 0
  %v1013 = vperm.slane %v1011, 0
  %v1016 = vadd.f32 %v1001, %v1012
  %v1017 = vadd.f32 %v1003, %v1012
  %v1018 = vadd.f32 %v1006, %v1013
  %v1019 = vadd.f32 %v1008, %v1013
  %v1020 = vadd.f32 %v1016, %v1017
  %v1021 = vrot.slane %v1020, 4
  %v1022 = vadd.f32 %v1020, %v1021
  %v1023 = vrot.slane %v1022, 2
  %v1024 = vadd.f32 %v1022, %v1023
  %v1025 = vrot.slane %v1024, 1
  %v1026 = vadd.f32 %v1024, %v1025
  %v1027 = vadd.f32 %v1018, %v1019
  %v1028 = vrot.slane %v1027, 4
  %v1029 = vadd.f32 %v1027, %v1028
  %v1030 = vrot.slane %v1029, 2
  %v1031 = vadd.f32 %v1029, %v1030
  %v1032 = vrot.slane %v1031, 1
  %v1033 = vadd.f32 %v1031, %v1032
  %v1034 = vmul.f32 %v1026, %v418
  %v1035 = vmul.f32 %v1033, %v418
  %v1036 = vmul.f32 %v1016, %v1016
  %v1037 = vmul.f32 %v1017, %v1017
  %v1038 = vmul.f32 %v1018, %v1018
  %v1039 = vmul.f32 %v1019, %v1019
  %v1040 = vadd.f32 %v1036, %v1037
  %v1041 = vrot.slane %v1040, 4
  %v1042 = vadd.f32 %v1040, %v1041
  %v1043 = vrot.slane %v1042, 2
  %v1044 = vadd.f32 %v1042, %v1043
  %v1045 = vrot.slane %v1044, 1
  %v1046 = vadd.f32 %v1044, %v1045
  %v1047 = vadd.f32 %v1038, %v1039
  %v1048 = vrot.slane %v1047, 4
  %v1049 = vadd.f32 %v1047, %v1048
  %v1050 = vrot.slane %v1049, 2
  %v1051 = vadd.f32 %v1049, %v1050
  %v1052 = vrot.slane %v1051, 1
  %v1053 = vadd.f32 %v1051, %v1052
  %v1054 = vmul.f32 %v1046, %v418
  %v1055 = vmul.f32 %v1053, %v418
  %v1056 = vmul.f32 %v1034, %v1034
  %v1057 = vmul.f32 %v1035, %v1035
  %v1058 = vsub.f32 %v1054, %v1056
  %v1059 = vsub.f32 %v1055, %v1057
  %v1060 = vmax.f32 %v1058, 0.0
  %v1061 = vmax.f32 %v1059, 0.0
  %v1062 = vsub.f32 %v1016, %v1034
  %v1063 = vsub.f32 %v1017, %v1034
  %v1064 = vsub.f32 %v1018, %v1035
  %v1065 = vsub.f32 %v1019, %v1035
  %v1066 = vadd.f32 %v1060, 1e-05
  %v1067 = vadd.f32 %v1061, 1e-05
  %v1068 = vrsqrt.pop %v1066
  %v1069 = vmul.f32 %v1068, %v1066
  %v1070 = vmul.f32 %v1069, %v1068
  %v1071 = vmul.f32 0.5, %v1070
  %v1072 = vsub.f32 1.5, %v1071
  %v1073 = vmul.f32 %v1068, %v1072
  %vm1074 = vweird.f32 %v1066
  %vm1075 = vweird.f32 %v1068
  %vm1076 = vmor %vm1074, %vm1075
  %v1077 = vsel %vm1076, %v1068, %v1073
  %v1078 = vrsqrt.pop %v1067
  %v1079 = vmul.f32 %v1078, %v1067
  %v1080 = vmul.f32 %v1079, %v1078
  %v1081 = vmul.f32 0.5, %v1080
  %v1082 = vsub.f32 1.5, %v1081
  %v1083 = vmul.f32 %v1078, %v1082
  %vm1084 = vweird.f32 %v1067
  %vm1085 = vweird.f32 %v1078
  %vm1086 = vmor %vm1084, %vm1085
  %v1087 = vsel %vm1086, %v1078, %v1083
  %v1088 = vmul.f32 %v1062, %v1077
  %v1089 = vmul.f32 %v1063, %v1077
  %v1090 = vmul.f32 %v1064, %v1087
  %v1091 = vmul.f32 %v1065, %v1087
  %v1093 = vrot.slane %v277, 1
  %v1096 = vrot.slane %v297, 1
  %v1097 = vadd.f32 %v277, 1.0
  %v1098 = vadd.f32 %v1093, 1.0
  %v1101 = vperm.slane %v1097, 0
  %v1102 = vperm.slane %v1098, 0
  %v1105 = vmul.f32 %v1088, %v1101
  %v1106 = vmul.f32 %v1089, %v1101
  %v1107 = vmul.f32 %v1090, %v1102
  %v1108 = vmul.f32 %v1091, %v1102
  %v1109 = vperm.slane %v297, 0
  %v1110 = vperm.slane %v1096, 0
  %v1113 = vadd.f32 %v1105, %v1109
  %v1114 = vadd.f32 %v1106, %v1109
  %v1115 = vadd.f32 %v1107, %v1110
  %v1116 = vadd.f32 %v1108, %v1110
  %vm1117 = vcmp.ge.f32.partialorder %v1113, 0.0
  %vm1118 = vcmp.ge.f32.partialorder %v1114, 0.0
  %vm1119 = vcmp.ge.f32.partialorder %v1115, 0.0
  %vm1120 = vcmp.ge.f32.partialorder %v1116, 0.0
  %v1121 = vmul.f32 %v1113, 0.2
  %v1122 = vmul.f32 %v1114, 0.2
  %v1123 = vmul.f32 %v1115, 0.2
  %v1124 = vmul.f32 %v1116, 0.2
  %v1125 = vsel %vm1117, %v1113, %v1121
  %v1126 = vsel %vm1118, %v1114, %v1122
  %v1127 = vsel %vm1119, %v1115, %v1123
  %v1128 = vsel %vm1120, %v1116, %v1124
  %v1129 = vld [vmem:[%s2] sm:$0xf]
  %v1130 = vld [vmem:[%s2 + $0x4] sm:$0xf]
  %v1131 = vld [vmem:[%s2 + $0x8] sm:$0xf]
  %v1132 = vld [vmem:[%s2 + $0xc] sm:$0xf]
  %v1133 = vld [vmem:[%s3] sm:$0xff]
  %v1134 = vld [vmem:[%s3 + $0x8] sm:$0xff]
  %v1135 = vld [vmem:[%s3 + $0x10] sm:$0xff]
  %v1136 = vld [vmem:[%s3 + $0x18] sm:$0xff]
  %v1137 = vld [vmem:[%s7] sm:$0x7]
  %v1138 = vpack.c.bf16 %v1126, %v1125
  %v1139 = vpack.c.bf16 %v1128, %v1127
  %v1140 = vld [vmem:[%s6] sm:$0xff]
  %v1141 = vld [vmem:[%s6 + $0x8] sm:$0xff]
  %v1142 = vld [vmem:[%s6 + $0x10] sm:$0xff]
  %v1143 = vld [vmem:[%s6 + $0x18] sm:$0xff]
  %v1144 = vld [vmem:[%s6 + $0x20] sm:$0xff]
  %v1145 = vld [vmem:[%s6 + $0x28] sm:$0xff]
  %v1146 = vld [vmem:[%s6 + $0x30] sm:$0xff]
  %v1147 = vld [vmem:[%s6 + $0x38] sm:$0xff]
  %v1148 = vld [vmem:[%s6 + $0x40] sm:$0xff]
  %v1149 = vld [vmem:[%s6 + $0x48] sm:$0xff]
  %v1150 = vld [vmem:[%s6 + $0x50] sm:$0xff]
  %v1151 = vld [vmem:[%s6 + $0x58] sm:$0xff]
  %v1152 = vld [vmem:[%s6 + $0x60] sm:$0xff]
  %v1153 = vld [vmem:[%s6 + $0x68] sm:$0xff]
  %v1154 = vld [vmem:[%s6 + $0x70] sm:$0xff]
  %v1155 = vld [vmem:[%s6 + $0x78] sm:$0xff]
  %v1172 = vunpack.c.l.b16 %v1140
  %v1173 = vunpack.c.h.b16 %v1140
  %v1174 = vunpack.c.l.b16 %v1141
  %v1175 = vunpack.c.h.b16 %v1141
  %v1176 = vunpack.c.l.b16 %v1142
  %v1177 = vunpack.c.h.b16 %v1142
  %v1178 = vunpack.c.l.b16 %v1143
  %v1179 = vunpack.c.h.b16 %v1143
  %v1180 = vunpack.c.l.b16 %v1144
  %v1181 = vunpack.c.h.b16 %v1144
  %v1182 = vunpack.c.l.b16 %v1145
  %v1183 = vunpack.c.h.b16 %v1145
  %v1184 = vunpack.c.l.b16 %v1146
  %v1185 = vunpack.c.h.b16 %v1146
  %v1186 = vunpack.c.l.b16 %v1147
  %v1187 = vunpack.c.h.b16 %v1147
  %v1188 = vunpack.c.l.b16 %v1148
  %v1189 = vunpack.c.h.b16 %v1148
  %v1190 = vunpack.c.l.b16 %v1149
  %v1191 = vunpack.c.h.b16 %v1149
  %v1192 = vunpack.c.l.b16 %v1150
  %v1193 = vunpack.c.h.b16 %v1150
  %v1194 = vunpack.c.l.b16 %v1151
  %v1195 = vunpack.c.h.b16 %v1151
  %v1196 = vunpack.c.l.b16 %v1152
  %v1197 = vunpack.c.h.b16 %v1152
  %v1198 = vunpack.c.l.b16 %v1153
  %v1199 = vunpack.c.h.b16 %v1153
  %v1200 = vunpack.c.l.b16 %v1154
  %v1201 = vunpack.c.h.b16 %v1154
  %v1202 = vunpack.c.l.b16 %v1155
  %v1203 = vunpack.c.h.b16 %v1155
  %v1204 = vpack.c.b16 %v1174, %v1172
  %v1205 = vpack.c.b16 %v1175, %v1173
  %v1206 = vpack.c.b16 %v1178, %v1176
  %v1207 = vpack.c.b16 %v1179, %v1177
  %v1208 = vpack.c.b16 %v1182, %v1180
  %v1209 = vpack.c.b16 %v1183, %v1181
  %v1210 = vpack.c.b16 %v1186, %v1184
  %v1211 = vpack.c.b16 %v1187, %v1185
  %v1212 = vpack.c.b16 %v1190, %v1188
  %v1213 = vpack.c.b16 %v1191, %v1189
  %v1214 = vpack.c.b16 %v1194, %v1192
  %v1215 = vpack.c.b16 %v1195, %v1193
  %v1216 = vpack.c.b16 %v1198, %v1196
  %v1217 = vpack.c.b16 %v1199, %v1197
  %v1218 = vpack.c.b16 %v1202, %v1200
  %v1219 = vpack.c.b16 %v1203, %v1201
  %1236 = vmatpush.bf16.msra.mxu0 %v1218
  %1237 = vmatpush.bf16.msra.mxu0 %v1216
  %1238 = vmatpush.bf16.msra.mxu0 %v1214
  %1239 = vmatpush.bf16.msra.mxu0 %v1212
  %1240 = vmatpush.bf16.msra.mxu0 %v1210
  %1241 = vmatpush.bf16.msra.mxu0 %v1208
  %1242 = vmatpush.bf16.msra.mxu0 %v1206
  %1243 = vmatpush.bf16.msra.mxu0 %v1204
  %1244 = vmatmul.bf16.gmra.mxu0 %v1138
  %v1245 = vpop.f32.mrf.mxu0
  %v1246 = vadd.f32 0.0, %v1245
  %v1247 = vpop.f32.mrf.mxu0
  %v1248 = vadd.f32 0.0, %v1247
  %1249 = vmatmul.bf16.gmra.mxu0 %v1139
  %v1250 = vpop.f32.mrf.mxu0
  %v1251 = vadd.f32 0.0, %v1250
  %v1252 = vpop.f32.mrf.mxu0
  %v1253 = vadd.f32 0.0, %v1252
  %1254 = vdwg.mxu0
  %1255 = vmatpush.bf16.msra.mxu0 %v1219
  %1256 = vmatpush.bf16.msra.mxu0 %v1217
  %1257 = vmatpush.bf16.msra.mxu0 %v1215
  %1258 = vmatpush.bf16.msra.mxu0 %v1213
  %1259 = vmatpush.bf16.msra.mxu0 %v1211
  %1260 = vmatpush.bf16.msra.mxu0 %v1209
  %1261 = vmatpush.bf16.msra.mxu0 %v1207
  %1262 = vmatpush.bf16.msra.mxu0 %v1205
  %1263 = vmatmul.bf16.gmra.mxu0 %v1138
  %v1264 = vpop.f32.mrf.mxu0
  %v1265 = vadd.f32 0.0, %v1264
  %v1266 = vpop.f32.mrf.mxu0
  %v1267 = vadd.f32 0.0, %v1266
  %1268 = vmatmul.bf16.gmra.mxu0 %v1139
  %v1269 = vpop.f32.mrf.mxu0
  %v1270 = vadd.f32 0.0, %v1269
  %v1271 = vpop.f32.mrf.mxu0
  %v1272 = vadd.f32 0.0, %v1271
  %1273 = vdwg.mxu0
  %1275 = vset.pattern.permute.xlu0 0
  %1276 = vperm.xlu0 %1275, %v1133
  %v1277 = vpop.permute.xlu0 %1276
  %1280 = vset.pattern.permute.xlu0 0
  %1281 = vperm.xlu0 %1280, %v1134
  %v1282 = vpop.permute.xlu0 %1281
  %1285 = vset.pattern.permute.xlu0 0
  %1286 = vperm.xlu0 %1285, %v1135
  %v1287 = vpop.permute.xlu0 %1286
  %1290 = vset.pattern.permute.xlu0 0
  %1291 = vperm.xlu0 %1290, %v1136
  %v1292 = vpop.permute.xlu0 %1291
  %v1294 = vmul.f32 %v1265, %v1277
  %v1295 = vmul.f32 %v1267, %v1282
  %v1296 = vmul.f32 %v1270, %v1287
  %v1297 = vmul.f32 %v1272, %v1292
  %v1298 = vpack.c.bf16 %v1294, %v1294
  %v1299 = vpack.c.bf16 %v1295, %v1295
  %v1300 = vpack.c.bf16 %v1296, %v1296
  %v1301 = vpack.c.bf16 %v1297, %v1297
  %v1304 = vunpack.c.l.b16 %v1129
  %v1305 = vunpack.c.l.b16 %v1130
  %v1306 = vpack.c.b16 %v1305, %v1304
  %v1309 = vunpack.c.l.b16 %v1298
  %v1310 = vunpack.c.l.b16 %v1299
  %v1311 = vpack.c.b16 %v1310, %v1309
  %v1314 = vsel %vm55, %v1306, 0
  %1316 = vmatpush.bf16.msra.mxu0 0
  %1317 = vmatpush.bf16.msra.mxu0 0
  %1318 = vmatpush.bf16.msra.mxu0 0
  %1319 = vmatpush.bf16.msra.mxu0 0
  %1320 = vmatpush.bf16.msra.mxu0 0
  %1321 = vmatpush.bf16.msra.mxu0 0
  %1322 = vmatpush.bf16.msra.mxu0 0
  %1323 = vmatpush.bf16.msra.mxu0 %v1311
  %1324 = vmatmul.bf16.gmra.mxu0 %v1314
  %v1325 = vpop.f32.mrf.mxu0
  %v1326 = vadd.f32 0.0, %v1325
  %v1327 = vpop.f32.mrf.mxu0
  %v1328 = vadd.f32 0.0, %v1327
  %1329 = vdwg.mxu0
  %v1332 = vunpack.c.l.b16 %v1131
  %v1333 = vunpack.c.l.b16 %v1132
  %v1334 = vpack.c.b16 %v1333, %v1332
  %v1337 = vunpack.c.l.b16 %v1300
  %v1338 = vunpack.c.l.b16 %v1301
  %v1339 = vpack.c.b16 %v1338, %v1337
  %v1342 = vsel %vm55, %v1334, 0
  %1344 = vmatpush.bf16.msra.mxu0 0
  %1345 = vmatpush.bf16.msra.mxu0 0
  %1346 = vmatpush.bf16.msra.mxu0 0
  %1347 = vmatpush.bf16.msra.mxu0 0
  %1348 = vmatpush.bf16.msra.mxu0 0
  %1349 = vmatpush.bf16.msra.mxu0 0
  %1350 = vmatpush.bf16.msra.mxu0 0
  %1351 = vmatpush.bf16.msra.mxu0 %v1339
  %1352 = vmatmul.bf16.gmra.mxu0 %v1342
  %v1353 = vpop.f32.mrf.mxu0
  %v1354 = vadd.f32 0.0, %v1353
  %v1355 = vpop.f32.mrf.mxu0
  %v1356 = vadd.f32 0.0, %v1355
  %1357 = vdwg.mxu0
  %v1358 = vmul.f32 %v1277, %v1326
  %v1359 = vmul.f32 %v1282, %v1328
  %v1360 = vmul.f32 %v1287, %v1354
  %v1361 = vmul.f32 %v1292, %v1356
  %v1362 = vsub.f32 %v1246, %v1358
  %v1363 = vsub.f32 %v1248, %v1359
  %v1364 = vsub.f32 %v1251, %v1360
  %v1365 = vsub.f32 %v1253, %v1361
  %v1366 = vperm.slane %v1137, 0
  %v1367 = vadd.f32 %v1362, %v1366
  %v1368 = vadd.f32 %v1363, %v1366
  %v1369 = vadd.f32 %v1364, %v1366
  %v1370 = vadd.f32 %v1365, %v1366
  %v1371 = vadd.f32 %v1367, %v1368
  %v1372 = vadd.f32 %v1371, %v1369
  %v1373 = vadd.f32 %v1372, %v1370
  %v1374 = vrot.slane %v1373, 4
  %v1375 = vadd.f32 %v1373, %v1374
  %v1376 = vrot.slane %v1375, 2
  %v1377 = vadd.f32 %v1375, %v1376
  %v1378 = vrot.slane %v1377, 1
  %v1379 = vadd.f32 %v1377, %v1378
  %v1380 = vrcp.pop 32.0
  %v1381 = vmul.f32 32.0, %v1380
  %v1382 = vsub.f32 1.0, %v1381
  %v1383 = vmul.f32 %v1380, %v1382
  %v1384 = vadd.f32 %v1380, %v1383
  %vm1385 = vweird.f32 %v1380
  %v1386 = vsel %vm1385, %v1380, %v1384
  %v1387 = vmul.f32 %v1379, %v1386
  %v1388 = vmul.f32 %v1367, %v1367
  %v1389 = vmul.f32 %v1368, %v1368
  %v1390 = vmul.f32 %v1369, %v1369
  %v1391 = vmul.f32 %v1370, %v1370
  %v1392 = vadd.f32 %v1388, %v1389
  %v1393 = vadd.f32 %v1392, %v1390
  %v1394 = vadd.f32 %v1393, %v1391
  %v1395 = vrot.slane %v1394, 4
  %v1396 = vadd.f32 %v1394, %v1395
  %v1397 = vrot.slane %v1396, 2
  %v1398 = vadd.f32 %v1396, %v1397
  %v1399 = vrot.slane %v1398, 1
  %v1400 = vadd.f32 %v1398, %v1399
  %v1401 = vmul.f32 %v1400, %v1386
  %v1402 = vmul.f32 %v1387, %v1387
  %v1403 = vsub.f32 %v1401, %v1402
  %v1404 = vmax.f32 %v1403, 0.0
  %v1405 = vsub.f32 %v1367, %v1387
  %v1406 = vsub.f32 %v1368, %v1387
  %v1407 = vsub.f32 %v1369, %v1387
  %v1408 = vsub.f32 %v1370, %v1387
  %v1409 = vadd.f32 %v1404, 1e-05
  %v1410 = vrsqrt.pop %v1409
  %v1411 = vmul.f32 %v1410, %v1409
  %v1412 = vmul.f32 %v1411, %v1410
  %v1413 = vmul.f32 0.5, %v1412
  %v1414 = vsub.f32 1.5, %v1413
  %v1415 = vmul.f32 %v1410, %v1414
  %vm1416 = vweird.f32 %v1409
  %vm1417 = vweird.f32 %v1410
  %vm1418 = vmor %vm1416, %vm1417
  %v1419 = vsel %vm1418, %v1410, %v1415
  %v1420 = vmul.f32 %v1405, %v1419
  %v1421 = vmul.f32 %v1406, %v1419
  %v1422 = vmul.f32 %v1407, %v1419
  %v1423 = vmul.f32 %v1408, %v1419
  %v1424 = vperm.slane %v1137, 1
  %v1425 = vmul.f32 %v1420, %v1424
  %v1426 = vmul.f32 %v1421, %v1424
  %v1427 = vmul.f32 %v1422, %v1424
  %v1428 = vmul.f32 %v1423, %v1424
  %v1429 = vperm.slane %v1137, 2
  %v1430 = vadd.f32 %v1425, %v1429
  %v1431 = vadd.f32 %v1426, %v1429
  %v1432 = vadd.f32 %v1427, %v1429
  %v1433 = vadd.f32 %v1428, %v1429
  %vm1434 = vcmp.ge.f32.partialorder %v1430, 0.0
  %vm1435 = vcmp.ge.f32.partialorder %v1431, 0.0
  %vm1436 = vcmp.ge.f32.partialorder %v1432, 0.0
  %vm1437 = vcmp.ge.f32.partialorder %v1433, 0.0
  %v1438 = vmul.f32 %v1430, 0.2
  %v1439 = vmul.f32 %v1431, 0.2
  %v1440 = vmul.f32 %v1432, 0.2
  %v1441 = vmul.f32 %v1433, 0.2
  %v1442 = vsel %vm1434, %v1430, %v1438
  %v1443 = vsel %vm1435, %v1431, %v1439
  %v1444 = vsel %vm1436, %v1432, %v1440
  %v1445 = vsel %vm1437, %v1433, %v1441
  %s1446 = scalar_lea.vmem %s7, 4
  %v1447 = vld [vmem:[%s1446] sm:$0x7]
  %v1448 = vpack.c.bf16 %v1443, %v1442
  %v1449 = vpack.c.bf16 %v1445, %v1444
  %s1450 = scalar_lea.vmem %s6, 128
  %v1451 = vld [vmem:[%s1450] sm:$0xff]
  %v1452 = vld [vmem:[%s1450 + $0x8] sm:$0xff]
  %v1453 = vld [vmem:[%s1450 + $0x10] sm:$0xff]
  %v1454 = vld [vmem:[%s1450 + $0x18] sm:$0xff]
  %v1455 = vld [vmem:[%s1450 + $0x20] sm:$0xff]
  %v1456 = vld [vmem:[%s1450 + $0x28] sm:$0xff]
  %v1457 = vld [vmem:[%s1450 + $0x30] sm:$0xff]
  %v1458 = vld [vmem:[%s1450 + $0x38] sm:$0xff]
  %v1459 = vld [vmem:[%s1450 + $0x40] sm:$0xff]
  %v1460 = vld [vmem:[%s1450 + $0x48] sm:$0xff]
  %v1461 = vld [vmem:[%s1450 + $0x50] sm:$0xff]
  %v1462 = vld [vmem:[%s1450 + $0x58] sm:$0xff]
  %v1463 = vld [vmem:[%s1450 + $0x60] sm:$0xff]
  %v1464 = vld [vmem:[%s1450 + $0x68] sm:$0xff]
  %v1465 = vld [vmem:[%s1450 + $0x70] sm:$0xff]
  %v1466 = vld [vmem:[%s1450 + $0x78] sm:$0xff]
  %v1483 = vunpack.c.l.b16 %v1451
  %v1484 = vunpack.c.h.b16 %v1451
  %v1485 = vunpack.c.l.b16 %v1452
  %v1486 = vunpack.c.h.b16 %v1452
  %v1487 = vunpack.c.l.b16 %v1453
  %v1488 = vunpack.c.h.b16 %v1453
  %v1489 = vunpack.c.l.b16 %v1454
  %v1490 = vunpack.c.h.b16 %v1454
  %v1491 = vunpack.c.l.b16 %v1455
  %v1492 = vunpack.c.h.b16 %v1455
  %v1493 = vunpack.c.l.b16 %v1456
  %v1494 = vunpack.c.h.b16 %v1456
  %v1495 = vunpack.c.l.b16 %v1457
  %v1496 = vunpack.c.h.b16 %v1457
  %v1497 = vunpack.c.l.b16 %v1458
  %v1498 = vunpack.c.h.b16 %v1458
  %v1499 = vunpack.c.l.b16 %v1459
  %v1500 = vunpack.c.h.b16 %v1459
  %v1501 = vunpack.c.l.b16 %v1460
  %v1502 = vunpack.c.h.b16 %v1460
  %v1503 = vunpack.c.l.b16 %v1461
  %v1504 = vunpack.c.h.b16 %v1461
  %v1505 = vunpack.c.l.b16 %v1462
  %v1506 = vunpack.c.h.b16 %v1462
  %v1507 = vunpack.c.l.b16 %v1463
  %v1508 = vunpack.c.h.b16 %v1463
  %v1509 = vunpack.c.l.b16 %v1464
  %v1510 = vunpack.c.h.b16 %v1464
  %v1511 = vunpack.c.l.b16 %v1465
  %v1512 = vunpack.c.h.b16 %v1465
  %v1513 = vunpack.c.l.b16 %v1466
  %v1514 = vunpack.c.h.b16 %v1466
  %v1515 = vpack.c.b16 %v1485, %v1483
  %v1516 = vpack.c.b16 %v1486, %v1484
  %v1517 = vpack.c.b16 %v1489, %v1487
  %v1518 = vpack.c.b16 %v1490, %v1488
  %v1519 = vpack.c.b16 %v1493, %v1491
  %v1520 = vpack.c.b16 %v1494, %v1492
  %v1521 = vpack.c.b16 %v1497, %v1495
  %v1522 = vpack.c.b16 %v1498, %v1496
  %v1523 = vpack.c.b16 %v1501, %v1499
  %v1524 = vpack.c.b16 %v1502, %v1500
  %v1525 = vpack.c.b16 %v1505, %v1503
  %v1526 = vpack.c.b16 %v1506, %v1504
  %v1527 = vpack.c.b16 %v1509, %v1507
  %v1528 = vpack.c.b16 %v1510, %v1508
  %v1529 = vpack.c.b16 %v1513, %v1511
  %v1530 = vpack.c.b16 %v1514, %v1512
  %1547 = vmatpush.bf16.msra.mxu0 %v1529
  %1548 = vmatpush.bf16.msra.mxu0 %v1527
  %1549 = vmatpush.bf16.msra.mxu0 %v1525
  %1550 = vmatpush.bf16.msra.mxu0 %v1523
  %1551 = vmatpush.bf16.msra.mxu0 %v1521
  %1552 = vmatpush.bf16.msra.mxu0 %v1519
  %1553 = vmatpush.bf16.msra.mxu0 %v1517
  %1554 = vmatpush.bf16.msra.mxu0 %v1515
  %1555 = vmatmul.bf16.gmra.mxu0 %v1448
  %v1556 = vpop.f32.mrf.mxu0
  %v1557 = vadd.f32 0.0, %v1556
  %v1558 = vpop.f32.mrf.mxu0
  %v1559 = vadd.f32 0.0, %v1558
  %1560 = vmatmul.bf16.gmra.mxu0 %v1449
  %v1561 = vpop.f32.mrf.mxu0
  %v1562 = vadd.f32 0.0, %v1561
  %v1563 = vpop.f32.mrf.mxu0
  %v1564 = vadd.f32 0.0, %v1563
  %1565 = vdwg.mxu0
  %1566 = vmatpush.bf16.msra.mxu0 %v1530
  %1567 = vmatpush.bf16.msra.mxu0 %v1528
  %1568 = vmatpush.bf16.msra.mxu0 %v1526
  %1569 = vmatpush.bf16.msra.mxu0 %v1524
  %1570 = vmatpush.bf16.msra.mxu0 %v1522
  %1571 = vmatpush.bf16.msra.mxu0 %v1520
  %1572 = vmatpush.bf16.msra.mxu0 %v1518
  %1573 = vmatpush.bf16.msra.mxu0 %v1516
  %1574 = vmatmul.bf16.gmra.mxu0 %v1448
  %v1575 = vpop.f32.mrf.mxu0
  %v1576 = vadd.f32 0.0, %v1575
  %v1577 = vpop.f32.mrf.mxu0
  %v1578 = vadd.f32 0.0, %v1577
  %1579 = vmatmul.bf16.gmra.mxu0 %v1449
  %v1580 = vpop.f32.mrf.mxu0
  %v1581 = vadd.f32 0.0, %v1580
  %v1582 = vpop.f32.mrf.mxu0
  %v1583 = vadd.f32 0.0, %v1582
  %1584 = vdwg.mxu0
  %v1585 = vmul.f32 %v1576, %v1277
  %v1586 = vmul.f32 %v1578, %v1282
  %v1587 = vmul.f32 %v1581, %v1287
  %v1588 = vmul.f32 %v1583, %v1292
  %v1589 = vpack.c.bf16 %v1585, %v1585
  %v1590 = vpack.c.bf16 %v1586, %v1586
  %v1591 = vpack.c.bf16 %v1587, %v1587
  %v1592 = vpack.c.bf16 %v1588, %v1588
  %v1595 = vunpack.c.l.b16 %v1589
  %v1596 = vunpack.c.l.b16 %v1590
  %v1597 = vpack.c.b16 %v1596, %v1595
  %1599 = vmatpush.bf16.msra.mxu0 0
  %1600 = vmatpush.bf16.msra.mxu0 0
  %1601 = vmatpush.bf16.msra.mxu0 0
  %1602 = vmatpush.bf16.msra.mxu0 0
  %1603 = vmatpush.bf16.msra.mxu0 0
  %1604 = vmatpush.bf16.msra.mxu0 0
  %1605 = vmatpush.bf16.msra.mxu0 0
  %1606 = vmatpush.bf16.msra.mxu0 %v1597
  %1607 = vmatmul.bf16.gmra.mxu0 %v1314
  %v1608 = vpop.f32.mrf.mxu0
  %v1609 = vadd.f32 0.0, %v1608
  %v1610 = vpop.f32.mrf.mxu0
  %v1611 = vadd.f32 0.0, %v1610
  %1612 = vdwg.mxu0
  %v1615 = vunpack.c.l.b16 %v1591
  %v1616 = vunpack.c.l.b16 %v1592
  %v1617 = vpack.c.b16 %v1616, %v1615
  %1619 = vmatpush.bf16.msra.mxu0 0
  %1620 = vmatpush.bf16.msra.mxu0 0
  %1621 = vmatpush.bf16.msra.mxu0 0
  %1622 = vmatpush.bf16.msra.mxu0 0
  %1623 = vmatpush.bf16.msra.mxu0 0
  %1624 = vmatpush.bf16.msra.mxu0 0
  %1625 = vmatpush.bf16.msra.mxu0 0
  %1626 = vmatpush.bf16.msra.mxu0 %v1617
  %1627 = vmatmul.bf16.gmra.mxu0 %v1342
  %v1628 = vpop.f32.mrf.mxu0
  %v1629 = vadd.f32 0.0, %v1628
  %v1630 = vpop.f32.mrf.mxu0
  %v1631 = vadd.f32 0.0, %v1630
  %1632 = vdwg.mxu0
  %v1633 = vmul.f32 %v1277, %v1609
  %v1634 = vmul.f32 %v1282, %v1611
  %v1635 = vmul.f32 %v1287, %v1629
  %v1636 = vmul.f32 %v1292, %v1631
  %v1637 = vsub.f32 %v1557, %v1633
  %v1638 = vsub.f32 %v1559, %v1634
  %v1639 = vsub.f32 %v1562, %v1635
  %v1640 = vsub.f32 %v1564, %v1636
  %v1641 = vperm.slane %v1447, 0
  %v1642 = vadd.f32 %v1637, %v1641
  %v1643 = vadd.f32 %v1638, %v1641
  %v1644 = vadd.f32 %v1639, %v1641
  %v1645 = vadd.f32 %v1640, %v1641
  %v1646 = vadd.f32 %v1642, %v1643
  %v1647 = vadd.f32 %v1646, %v1644
  %v1648 = vadd.f32 %v1647, %v1645
  %v1649 = vrot.slane %v1648, 4
  %v1650 = vadd.f32 %v1648, %v1649
  %v1651 = vrot.slane %v1650, 2
  %v1652 = vadd.f32 %v1650, %v1651
  %v1653 = vrot.slane %v1652, 1
  %v1654 = vadd.f32 %v1652, %v1653
  %v1655 = vmul.f32 %v1654, %v1386
  %v1656 = vmul.f32 %v1642, %v1642
  %v1657 = vmul.f32 %v1643, %v1643
  %v1658 = vmul.f32 %v1644, %v1644
  %v1659 = vmul.f32 %v1645, %v1645
  %v1660 = vadd.f32 %v1656, %v1657
  %v1661 = vadd.f32 %v1660, %v1658
  %v1662 = vadd.f32 %v1661, %v1659
  %v1663 = vrot.slane %v1662, 4
  %v1664 = vadd.f32 %v1662, %v1663
  %v1665 = vrot.slane %v1664, 2
  %v1666 = vadd.f32 %v1664, %v1665
  %v1667 = vrot.slane %v1666, 1
  %v1668 = vadd.f32 %v1666, %v1667
  %v1669 = vmul.f32 %v1668, %v1386
  %v1670 = vmul.f32 %v1655, %v1655
  %v1671 = vsub.f32 %v1669, %v1670
  %v1672 = vmax.f32 %v1671, 0.0
  %v1673 = vsub.f32 %v1642, %v1655
  %v1674 = vsub.f32 %v1643, %v1655
  %v1675 = vsub.f32 %v1644, %v1655
  %v1676 = vsub.f32 %v1645, %v1655
  %v1677 = vadd.f32 %v1672, 1e-05
  %v1678 = vrsqrt.pop %v1677
  %v1679 = vmul.f32 %v1678, %v1677
  %v1680 = vmul.f32 %v1679, %v1678
  %v1681 = vmul.f32 0.5, %v1680
  %v1682 = vsub.f32 1.5, %v1681
  %v1683 = vmul.f32 %v1678, %v1682
  %vm1684 = vweird.f32 %v1677
  %vm1685 = vweird.f32 %v1678
  %vm1686 = vmor %vm1684, %vm1685
  %v1687 = vsel %vm1686, %v1678, %v1683
  %v1688 = vmul.f32 %v1673, %v1687
  %v1689 = vmul.f32 %v1674, %v1687
  %v1690 = vmul.f32 %v1675, %v1687
  %v1691 = vmul.f32 %v1676, %v1687
  %v1692 = vperm.slane %v1447, 1
  %v1693 = vmul.f32 %v1688, %v1692
  %v1694 = vmul.f32 %v1689, %v1692
  %v1695 = vmul.f32 %v1690, %v1692
  %v1696 = vmul.f32 %v1691, %v1692
  %v1697 = vperm.slane %v1447, 2
  %v1698 = vadd.f32 %v1693, %v1697
  %v1699 = vadd.f32 %v1694, %v1697
  %v1700 = vadd.f32 %v1695, %v1697
  %v1701 = vadd.f32 %v1696, %v1697
  %vm1702 = vcmp.ge.f32.partialorder %v1698, 0.0
  %vm1703 = vcmp.ge.f32.partialorder %v1699, 0.0
  %vm1704 = vcmp.ge.f32.partialorder %v1700, 0.0
  %vm1705 = vcmp.ge.f32.partialorder %v1701, 0.0
  %v1706 = vmul.f32 %v1698, 0.2
  %v1707 = vmul.f32 %v1699, 0.2
  %v1708 = vmul.f32 %v1700, 0.2
  %v1709 = vmul.f32 %v1701, 0.2
  %v1710 = vsel %vm1702, %v1698, %v1706
  %v1711 = vsel %vm1703, %v1699, %v1707
  %v1712 = vsel %vm1704, %v1700, %v1708
  %v1713 = vsel %vm1705, %v1701, %v1709
  %1714 = vst [vmem:[%s8] sm:$0xff] %v1710
  %1715 = vst [vmem:[%s8 + $0x8] sm:$0xff] %v1711
  %1716 = vst [vmem:[%s8 + $0x10] sm:$0xff] %v1712
  %1717 = vst [vmem:[%s8 + $0x18] sm:$0xff] %v1713
  // Predicated region
  $region34: #{decoder5_forward.1} parent=0 // pred_check
    _
  $region35: #{decoder5_forward.1} parent=0 // pred_check_branch
    %1719 = sbr.rel (0) target = $region37
  $region36: #{decoder5_forward.1} parent=0 // pred_region
    _
  $region37: #{decoder5_forward.1} parent=0 // pred_fallthru
    _
  // Predicated region
  $region38: #{decoder5_forward.1} parent=0 // pred_check
    _
  $region39: #{decoder5_forward.1} parent=0 // pred_check_branch
    %1721 = sbr.rel (0) target = $region41
  $region40: #{decoder5_forward.1} parent=0 // pred_region
    _
  $region41: #{decoder5_forward.1} parent=0 // pred_fallthru
    _

</llo_original>
